<compile_context>
chip_gen: v6e
topology: v6e:2x2x1
jax: 0.10.0
libtpu: 0.0.40
codegen_flags: <defaults>
</compile_context>

<pallas_src>
import jax
import jax.numpy as jnp
from jax import lax
from jax.experimental import pallas as pl
from jax.experimental.pallas import tpu as pltpu

NUM_GROUPS = 8
EPS = 1e-5


def _basic_block_kernel(x_ref, p_ref, w_ref, mask_ref, seg_ref, segt_ref, sg_ref,
                        o_ref, hcat_ref):
    """One grid step: K batch samples packed along lanes -> (C, K*L) slab."""
    C = x_ref.shape[1]
    KL = x_ref.shape[2]

    x = x_ref[0].astype(jnp.float32)          # (C, KL)

    # --- resident constants (DMA'd once; block index never changes) ---
    seg = seg_ref[...]                        # (KL, K)  per-sample indicator
    segt = segt_ref[...]                      # (K, KL)  its transpose
    sg2 = sg_ref[...]                         # (2C, 2C) blockdiag same-group / (gs*L)
    not_left = mask_ref[0:1, :]               # (1, KL)  0 at per-sample left edge
    not_right = mask_ref[1:2, :]              # (1, KL)  0 at per-sample right edge

    # packed per-channel parameters (C, 8): [g1, be1, b1, g2, be2, b2, 0, 0]
    g1 = p_ref[:, 0:1]
    be1 = p_ref[:, 1:2]
    b1 = p_ref[:, 2:3]
    g2 = p_ref[:, 3:4]
    be2 = p_ref[:, 4:5]
    b2 = p_ref[:, 5:6]
    w1 = w_ref[0]                             # (C, 3C)  conv dtype (bf16 by default)
    w2 = w_ref[1]

    def group_norm(h, gamma, beta):
        # stacked segmented stats: one deep-contraction matmul instead of two
        hs = jnp.concatenate([h, h * h], axis=0)                          # (2C, KL)
        ss = jnp.dot(hs, seg, preferred_element_type=jnp.float32)         # (2C, K)
        mm = jnp.dot(sg2, ss, preferred_element_type=jnp.float32)         # (2C, K)
        mean = mm[:C]
        msq = mm[C:]
        inv = lax.rsqrt(msq - mean * mean + EPS)
        scale = inv * gamma                                               # (C, K)
        shift = beta - mean * scale                                       # (C, K)
        sf = jnp.concatenate([scale, shift], axis=0)                      # (2C, K)
        sf_l = jnp.dot(sf, segt, preferred_element_type=jnp.float32)      # (2C, KL)
        return h * sf_l[:C] + sf_l[C:]

    def conv3(h, w, bias):
        # shifted copies zeroed at per-sample boundaries, written into the
        # persistent (3C, KL) scratch (also performs the bf16 cast in-place).
        cd = hcat_ref.dtype
        hcat_ref[0:C] = (pltpu.roll(h, shift=1, axis=1) * not_left).astype(cd)
        hcat_ref[C:2 * C] = h.astype(cd)
        hcat_ref[2 * C:] = (pltpu.roll(h, shift=KL - 1, axis=1) * not_right).astype(cd)
        return jnp.dot(w, hcat_ref[...], preferred_element_type=jnp.float32) + bias

    # out = conv1(relu(bn1(x)))
    h1 = jnp.maximum(group_norm(x, g1, be1), 0.0)
    o1 = conv3(h1, w1, b1)
    # out = conv2(relu(bn2(out)))
    h2 = jnp.maximum(group_norm(o1, g2, be2), 0.0)
    o2 = conv3(h2, w2, b2)
    # out = out + shortcut(x)   (identity shortcut)
    o_ref[0] = (o2 + x).astype(o_ref.dtype)


def _pick_samples_per_step(N, C, L, max_slab_bytes=256 * 1024):
    """Pick K samples/step. Prefer K*L % 128 == 0 (unmasked lane-dense stores),
    then M = N // K >= 2 (v7x megacore), then K*L >= 512 (amortize per-step
    overhead), under a v5e-safe slab budget."""
    candidates = [k for k in range(1, N + 1)
                  if N % k == 0 and C * k * L * 4 <= max_slab_bytes]
    if not candidates:
        candidates = [1]

    def score(k):
        kl = k * L
        m = N // k
        return (int(kl % 128 == 0),
                int(m >= 2 or N == 1),
                int(kl >= 512),
                kl)

    return max(candidates, key=score)


def basic_block_1d(x, params, num_groups=NUM_GROUPS, conv_dtype=jnp.bfloat16):
    N, C, L = x.shape
    g1, be1, w1, b1, g2, be2, w2, b2 = params
    assert C % num_groups == 0
    gs = C // num_groups

    K = _pick_samples_per_step(N, C, L)
    M = N // K
    KL = K * L

    # pack K samples along the lane axis -> (M, C, K*L) lane-dense slabs
    if K == 1:
        xp = x
    else:
        xp = x.reshape(M, K, C, L).transpose(0, 2, 1, 3).reshape(M, C, KL)

    # six per-channel vectors packed into one (C, 8) slab (single resident DMA)
    zeros = jnp.zeros_like(g1)
    pvec = jnp.stack([g1, be1, b1, g2, be2, b2, zeros, zeros],
                     axis=1).astype(jnp.float32)                            # (C, 8)

    # fuse the 3 conv taps: (Cout, Cin, 3) -> (Cout, 3*Cin); tap order
    # [k=0 (x[l-1]), k=1 (x[l]), k=2 (x[l+1])] matches the h_cat row layout.
    def cat_w(w):
        return jnp.concatenate([w[:, :, 0], w[:, :, 1], w[:, :, 2]], axis=1)

    w_cat = jnp.stack([cat_w(w1), cat_w(w2)], axis=0).astype(conv_dtype)    # (2, C, 3C)

    # ---- grid-invariant constants, built once and kept resident in VMEM ----
    lane = jnp.arange(KL, dtype=jnp.int32)
    lane_in_sample = lane % L
    not_left = (lane_in_sample != 0).astype(jnp.float32)
    not_right = (lane_in_sample != (L - 1)).astype(jnp.float32)
    masks = jnp.zeros((8, KL), jnp.float32).at[0].set(not_left).at[1].set(not_right)

    sample_of_lane = lane // L
    seg = (sample_of_lane[:, None] == jnp.arange(K)[None, :]).astype(jnp.float32)  # (KL, K)
    seg_t = seg.T                                                                  # (K, KL)

    grp = jnp.arange(C, dtype=jnp.int32) // gs
    sg = (grp[:, None] == grp[None, :]).astype(jnp.float32) * (1.0 / float(gs * L))
    zcc = jnp.zeros((C, C), jnp.float32)
    sg2 = jnp.concatenate([jnp.concatenate([sg, zcc], axis=1),
                           jnp.concatenate([zcc, sg], axis=1)], axis=0)            # (2C, 2C)

    x_spec = pl.BlockSpec((1, C, KL), lambda m: (m, 0, 0))
    w_spec = pl.BlockSpec((2, C, 3 * C), lambda m: (0, 0, 0))

    def const2d(shape):
        return pl.BlockSpec(shape, lambda m: (0, 0))

    out_packed = pl.pallas_call(
        _basic_block_kernel,
        out_shape=jax.ShapeDtypeStruct((M, C, KL), x.dtype),
        grid_spec=pltpu.PrefetchScalarGridSpec(
            num_scalar_prefetch=0,
            grid=(M,),
            in_specs=[x_spec,
                      const2d((C, 8)),
                      w_spec,
                      const2d((8, KL)),
                      const2d((KL, K)),
                      const2d((K, KL)),
                      const2d((2 * C, 2 * C))],
            out_specs=x_spec,
            scratch_shapes=[pltpu.VMEM((3 * C, KL), conv_dtype)],
        ),
        compiler_params=pltpu.CompilerParams(
            dimension_semantics=("parallel",),
            # 32 MiB: raises v5e's 16 MiB scoped default, matches v6e/v7x default,
            # well under v7x's 64 MiB physical VMEM per TC.
            vmem_limit_bytes=32 * 1024 * 1024,
            # let XLA fuse the sample-packing transpose into the pallas_call input.
            allow_input_fusion=[True, False, False, False, False, False, False],
        ),
    )(xp, pvec, w_cat, masks, seg, seg_t, sg2)

    if K == 1:
        return out_packed
    return out_packed.reshape(M, C, K, L).transpose(0, 2, 1, 3).reshape(N, C, L)


def _ref_forward(x, params, num_groups=NUM_GROUPS):
    """Pure-JAX reference matching the PyTorch forward."""
    g1, be1, w1, b1, g2, be2, w2, b2 = params

    def gn(t, gamma, beta):
        N, C, L = t.shape
        tg = t.reshape(N, num_groups, -1)
        mean = tg.mean(-1, keepdims=True)
        var = tg.var(-1, keepdims=True)
        tn = ((tg - mean) / jnp.sqrt(var + EPS)).reshape(N, C, L)
        return tn * gamma[None, :, None] + beta[None, :, None]

    def conv(t, w, b):
        out = lax.conv_general_dilated(t, w, window_strides=(1,), padding=[(1, 1)],
                                       dimension_numbers=("NCH", "OIH", "NCH"))
        return out + b[None, :, None]

    h1 = jax.nn.relu(gn(x, g1, be1))
    o1 = conv(h1, w1, b1)
    h2 = jax.nn.relu(gn(o1, g2, be2))
    o2 = conv(h2, w2, b2)
    return o2 + x


if __name__ == "__main__":
    N, C, L = 4, 32, 64   # in_planes = planes = 32, num_groups = 8, stride = 1
    key = jax.random.PRNGKey(0)
    keys = jax.random.split(key, 9)

    x = jax.random.normal(keys[0], (N, C, L), dtype=jnp.float32)
    g1 = 1.0 + 0.1 * jax.random.normal(keys[1], (C,), dtype=jnp.float32)
    be1 = 0.1 * jax.random.normal(keys[2], (C,), dtype=jnp.float32)
    w1 = 0.1 * jax.random.normal(keys[3], (C, C, 3), dtype=jnp.float32)
    b1 = 0.1 * jax.random.normal(keys[4], (C,), dtype=jnp.float32)
    g2 = 1.0 + 0.1 * jax.random.normal(keys[5], (C,), dtype=jnp.float32)
    be2 = 0.1 * jax.random.normal(keys[6], (C,), dtype=jnp.float32)
    w2 = 0.1 * jax.random.normal(keys[7], (C, C, 3), dtype=jnp.float32)
    b2 = 0.1 * jax.random.normal(keys[8], (C,), dtype=jnp.float32)
    params = (g1, be1, w1, b1, g2, be2, w2, b2)

    ref = jax.block_until_ready(_ref_forward(x, params))

    # 1) exact f32 conv path: validates the restructured kernel math tightly.
    out_f32 = jax.block_until_ready(basic_block_1d(x, params, conv_dtype=jnp.float32))
    if not bool(jnp.allclose(out_f32, ref, rtol=5e-4, atol=5e-4)):
        raise AssertionError(
            f"f32 path mismatch, max abs err = {float(jnp.max(jnp.abs(out_f32 - ref)))}")

    # 2) default bf16-MXU conv path: tolerance sized for bf16 operand rounding
    #    (~2^-9 relative per product) across two k=3 convs; GN stats stay f32.
    out = jax.block_until_ready(basic_block_1d(x, params))
    if not bool(jnp.allclose(out, ref, rtol=3e-2, atol=3e-2)):
        raise AssertionError(
            f"bf16-conv path mismatch, max abs err = {float(jnp.max(jnp.abs(out - ref)))}")

    print("KERNEL_OK")
</pallas_src>

<mosaic_0001>
module attributes {stable_mosaic.version = 11 : i64} {
  func.func @_basic_block_kernel(%arg0: i32, %arg1: memref<1x32x128xf32, #tpu.memory_space<vmem>>, %arg2: memref<32x8xf32, #tpu.memory_space<vmem>>, %arg3: memref<2x32x96xf32, #tpu.memory_space<vmem>>, %arg4: memref<8x128xf32, #tpu.memory_space<vmem>>, %arg5: memref<128x2xf32, #tpu.memory_space<vmem>>, %arg6: memref<2x128xf32, #tpu.memory_space<vmem>>, %arg7: memref<64x64xf32, #tpu.memory_space<vmem>>, %arg8: memref<1x32x128xf32, #tpu.memory_space<vmem>>, %arg9: memref<96x128xf32, #tpu.memory_space<vmem>>) attributes {dimension_semantics = [#tpu.dimension_semantics<parallel>], iteration_bounds = array<i64: 2>, scalar_prefetch = 0 : i64, scratch_operands = 1 : i64, tpu.core_type = #tpu.core_type<tc>, window_params = [{transform_indices = @transform_0, window_bounds = array<i64: 1, 32, 128>}, {pipeline_mode = #tpu.pipeline_mode<synchronous>, transform_indices = @transform_1, window_bounds = array<i64: 32, 8>}, {pipeline_mode = #tpu.pipeline_mode<synchronous>, transform_indices = @transform_2, window_bounds = array<i64: 2, 32, 96>}, {pipeline_mode = #tpu.pipeline_mode<synchronous>, transform_indices = @transform_3, window_bounds = array<i64: 8, 128>}, {pipeline_mode = #tpu.pipeline_mode<synchronous>, transform_indices = @transform_4, window_bounds = array<i64: 128, 2>}, {pipeline_mode = #tpu.pipeline_mode<synchronous>, transform_indices = @transform_5, window_bounds = array<i64: 2, 128>}, {pipeline_mode = #tpu.pipeline_mode<synchronous>, transform_indices = @transform_6, window_bounds = array<i64: 64, 64>}, {transform_indices = @transform_7, window_bounds = array<i64: 1, 32, 128>}]} {
    %c0 = arith.constant 0 : index
    %c0_0 = arith.constant 0 : index
    %c0_1 = arith.constant 0 : index
    %0 = vector.load %arg1[%c0, %c0_0, %c0_1] : memref<1x32x128xf32, #tpu.memory_space<vmem>>, vector<1x32x128xf32>
    %1 = vector.shape_cast %0 : vector<1x32x128xf32> to vector<32x128xf32>
    %c0_2 = arith.constant 0 : index
    %c0_3 = arith.constant 0 : index
    %2 = vector.load %arg5[%c0_2, %c0_3] : memref<128x2xf32, #tpu.memory_space<vmem>>, vector<128x2xf32>
    %c0_4 = arith.constant 0 : index
    %c0_5 = arith.constant 0 : index
    %3 = vector.load %arg6[%c0_4, %c0_5] : memref<2x128xf32, #tpu.memory_space<vmem>>, vector<2x128xf32>
    %c0_6 = arith.constant 0 : index
    %c0_7 = arith.constant 0 : index
    %4 = vector.load %arg7[%c0_6, %c0_7] : memref<64x64xf32, #tpu.memory_space<vmem>>, vector<64x64xf32>
    %c0_8 = arith.constant 0 : index
    %c0_9 = arith.constant 0 : index
    %5 = vector.load %arg4[%c0_8, %c0_9] : memref<8x128xf32, #tpu.memory_space<vmem>>, vector<1x128xf32>
    %c1 = arith.constant 1 : index
    %c0_10 = arith.constant 0 : index
    %6 = vector.load %arg4[%c1, %c0_10] : memref<8x128xf32, #tpu.memory_space<vmem>>, vector<1x128xf32>
    %c0_11 = arith.constant 0 : index
    %c0_12 = arith.constant 0 : index
    %7 = vector.load %arg2[%c0_11, %c0_12] : memref<32x8xf32, #tpu.memory_space<vmem>>, vector<32x1xf32>
    %c0_13 = arith.constant 0 : index
    %c1_14 = arith.constant 1 : index
    %8 = vector.load %arg2[%c0_13, %c1_14] : memref<32x8xf32, #tpu.memory_space<vmem>>, vector<32x1xf32>
    %c0_15 = arith.constant 0 : index
    %c2 = arith.constant 2 : index
    %9 = vector.load %arg2[%c0_15, %c2] : memref<32x8xf32, #tpu.memory_space<vmem>>, vector<32x1xf32>
    %c0_16 = arith.constant 0 : index
    %c3 = arith.constant 3 : index
    %10 = vector.load %arg2[%c0_16, %c3] : memref<32x8xf32, #tpu.memory_space<vmem>>, vector<32x1xf32>
    %c0_17 = arith.constant 0 : index
    %c4 = arith.constant 4 : index
    %11 = vector.load %arg2[%c0_17, %c4] : memref<32x8xf32, #tpu.memory_space<vmem>>, vector<32x1xf32>
    %c0_18 = arith.constant 0 : index
    %c5 = arith.constant 5 : index
    %12 = vector.load %arg2[%c0_18, %c5] : memref<32x8xf32, #tpu.memory_space<vmem>>, vector<32x1xf32>
    %c0_19 = arith.constant 0 : index
    %c0_20 = arith.constant 0 : index
    %c0_21 = arith.constant 0 : index
    %13 = vector.load %arg3[%c0_19, %c0_20, %c0_21] : memref<2x32x96xf32, #tpu.memory_space<vmem>>, vector<1x32x96xf32>
    %14 = vector.shape_cast %13 : vector<1x32x96xf32> to vector<32x96xf32>
    %c1_22 = arith.constant 1 : index
    %c0_23 = arith.constant 0 : index
    %c0_24 = arith.constant 0 : index
    %15 = vector.load %arg3[%c1_22, %c0_23, %c0_24] : memref<2x32x96xf32, #tpu.memory_space<vmem>>, vector<1x32x96xf32>
    %16 = vector.shape_cast %15 : vector<1x32x96xf32> to vector<32x96xf32>
    %17 = arith.mulf %1, %1 : vector<32x128xf32>
    %18 = tpu.concatenate %1, %17 in 0 : vector<32x128xf32>, vector<32x128xf32> -> vector<64x128xf32>
    %cst = arith.constant dense<0.000000e+00> : vector<64x2xf32>
    %19 = tpu.matmul %18, %2, %cst {dimension_numbers = #tpu.dot_dimension_numbers<[1], [0], [0], [1], [0, 0, 1, 1], [], []>} : vector<64x128xf32>, vector<128x2xf32>, vector<64x2xf32> -> vector<64x2xf32>
    %cst_25 = arith.constant dense<0.000000e+00> : vector<64x2xf32>
    %20 = tpu.matmul %4, %19, %cst_25 {dimension_numbers = #tpu.dot_dimension_numbers<[1], [0], [0], [1], [0, 0, 1, 1], [], []>} : vector<64x64xf32>, vector<64x2xf32>, vector<64x2xf32> -> vector<64x2xf32>
    %21 = vector.extract_strided_slice %20 {offsets = [0, 0], sizes = [32, 2], strides = [1, 1]} : vector<64x2xf32> to vector<32x2xf32>
    %22 = vector.extract_strided_slice %20 {offsets = [32, 0], sizes = [32, 2], strides = [1, 1]} : vector<64x2xf32> to vector<32x2xf32>
    %23 = arith.mulf %21, %21 : vector<32x2xf32>
    %24 = arith.subf %22, %23 : vector<32x2xf32>
    %cst_26 = arith.constant 9.99999974E-6 : f32
    %25 = vector.broadcast %cst_26 : f32 to vector<32x2xf32>
    %26 = arith.addf %24, %25 : vector<32x2xf32>
    %27 = math.rsqrt %26 : vector<32x2xf32>
    %28 = vector.broadcast %7 : vector<32x1xf32> to vector<32x2xf32>
    %29 = arith.mulf %27, %28 : vector<32x2xf32>
    %30 = arith.mulf %21, %29 : vector<32x2xf32>
    %31 = vector.broadcast %8 : vector<32x1xf32> to vector<32x2xf32>
    %32 = arith.subf %31, %30 : vector<32x2xf32>
    %33 = tpu.concatenate %29, %32 in 0 : vector<32x2xf32>, vector<32x2xf32> -> vector<64x2xf32>
    %cst_27 = arith.constant dense<0.000000e+00> : vector<64x128xf32>
    %34 = tpu.matmul %33, %3, %cst_27 {dimension_numbers = #tpu.dot_dimension_numbers<[1], [0], [0], [1], [0, 0, 1, 1], [], []>} : vector<64x2xf32>, vector<2x128xf32>, vector<64x128xf32> -> vector<64x128xf32>
    %35 = vector.extract_strided_slice %34 {offsets = [0, 0], sizes = [32, 128], strides = [1, 1]} : vector<64x128xf32> to vector<32x128xf32>
    %36 = arith.mulf %1, %35 : vector<32x128xf32>
    %37 = vector.extract_strided_slice %34 {offsets = [32, 0], sizes = [32, 128], strides = [1, 1]} : vector<64x128xf32> to vector<32x128xf32>
    %38 = arith.addf %36, %37 : vector<32x128xf32>
    %cst_28 = arith.constant 0.000000e+00 : f32
    %39 = vector.broadcast %cst_28 : f32 to vector<32x128xf32>
    %40 = arith.maximumf %38, %39 : vector<32x128xf32>
    %c1_i32 = arith.constant 1 : i32
    %41 = tpu.dynamic_rotate %40 by %c1_i32 dim 1 : vector<32x128xf32>, i32 -> vector<32x128xf32>
    %42 = vector.broadcast %5 : vector<1x128xf32> to vector<32x128xf32>
    %43 = arith.mulf %41, %42 : vector<32x128xf32>
    %c0_29 = arith.constant 0 : index
    %c0_30 = arith.constant 0 : index
    %44 = vector.load %arg9[%c0_29, %c0_30] : memref<96x128xf32, #tpu.memory_space<vmem>>, vector<32x128xf32>
    tpu.vector_store %arg9[%c0_29, %c0_30], %43 {strides = array<i32>} : memref<96x128xf32, #tpu.memory_space<vmem>>, vector<32x128xf32>,
    %c32 = arith.constant 32 : index
    %c0_31 = arith.constant 0 : index
    %45 = vector.load %arg9[%c32, %c0_31] : memref<96x128xf32, #tpu.memory_space<vmem>>, vector<32x128xf32>
    tpu.vector_store %arg9[%c32, %c0_31], %40 {strides = array<i32>} : memref<96x128xf32, #tpu.memory_space<vmem>>, vector<32x128xf32>,
    %c127_i32 = arith.constant 127 : i32
    %46 = tpu.dynamic_rotate %40 by %c127_i32 dim 1 : vector<32x128xf32>, i32 -> vector<32x128xf32>
    %47 = vector.broadcast %6 : vector<1x128xf32> to vector<32x128xf32>
    %48 = arith.mulf %46, %47 : vector<32x128xf32>
    %c64 = arith.constant 64 : index
    %c0_32 = arith.constant 0 : index
    %49 = vector.load %arg9[%c64, %c0_32] : memref<96x128xf32, #tpu.memory_space<vmem>>, vector<32x128xf32>
    tpu.vector_store %arg9[%c64, %c0_32], %48 {strides = array<i32>} : memref<96x128xf32, #tpu.memory_space<vmem>>, vector<32x128xf32>,
    %c0_33 = arith.constant 0 : index
    %c0_34 = arith.constant 0 : index
    %50 = vector.load %arg9[%c0_33, %c0_34] : memref<96x128xf32, #tpu.memory_space<vmem>>, vector<96x128xf32>
    %cst_35 = arith.constant dense<0.000000e+00> : vector<32x128xf32>
    %51 = tpu.matmul %14, %50, %cst_35 {dimension_numbers = #tpu.dot_dimension_numbers<[1], [0], [0], [1], [0, 0, 1, 1], [], []>} : vector<32x96xf32>, vector<96x128xf32>, vector<32x128xf32> -> vector<32x128xf32>
    %52 = vector.broadcast %9 : vector<32x1xf32> to vector<32x128xf32>
    %53 = arith.addf %51, %52 : vector<32x128xf32>
    %54 = arith.mulf %53, %53 : vector<32x128xf32>
    %55 = tpu.concatenate %53, %54 in 0 : vector<32x128xf32>, vector<32x128xf32> -> vector<64x128xf32>
    %cst_36 = arith.constant dense<0.000000e+00> : vector<64x2xf32>
    %56 = tpu.matmul %55, %2, %cst_36 {dimension_numbers = #tpu.dot_dimension_numbers<[1], [0], [0], [1], [0, 0, 1, 1], [], []>} : vector<64x128xf32>, vector<128x2xf32>, vector<64x2xf32> -> vector<64x2xf32>
    %cst_37 = arith.constant dense<0.000000e+00> : vector<64x2xf32>
    %57 = tpu.matmul %4, %56, %cst_37 {dimension_numbers = #tpu.dot_dimension_numbers<[1], [0], [0], [1], [0, 0, 1, 1], [], []>} : vector<64x64xf32>, vector<64x2xf32>, vector<64x2xf32> -> vector<64x2xf32>
    %58 = vector.extract_strided_slice %57 {offsets = [0, 0], sizes = [32, 2], strides = [1, 1]} : vector<64x2xf32> to vector<32x2xf32>
    %59 = vector.extract_strided_slice %57 {offsets = [32, 0], sizes = [32, 2], strides = [1, 1]} : vector<64x2xf32> to vector<32x2xf32>
    %60 = arith.mulf %58, %58 : vector<32x2xf32>
    %61 = arith.subf %59, %60 : vector<32x2xf32>
    %cst_38 = arith.constant 9.99999974E-6 : f32
    %62 = vector.broadcast %cst_38 : f32 to vector<32x2xf32>
    %63 = arith.addf %61, %62 : vector<32x2xf32>
    %64 = math.rsqrt %63 : vector<32x2xf32>
    %65 = vector.broadcast %10 : vector<32x1xf32> to vector<32x2xf32>
    %66 = arith.mulf %64, %65 : vector<32x2xf32>
    %67 = arith.mulf %58, %66 : vector<32x2xf32>
    %68 = vector.broadcast %11 : vector<32x1xf32> to vector<32x2xf32>
    %69 = arith.subf %68, %67 : vector<32x2xf32>
    %70 = tpu.concatenate %66, %69 in 0 : vector<32x2xf32>, vector<32x2xf32> -> vector<64x2xf32>
    %cst_39 = arith.constant dense<0.000000e+00> : vector<64x128xf32>
    %71 = tpu.matmul %70, %3, %cst_39 {dimension_numbers = #tpu.dot_dimension_numbers<[1], [0], [0], [1], [0, 0, 1, 1], [], []>} : vector<64x2xf32>, vector<2x128xf32>, vector<64x128xf32> -> vector<64x128xf32>
    %72 = vector.extract_strided_slice %71 {offsets = [0, 0], sizes = [32, 128], strides = [1, 1]} : vector<64x128xf32> to vector<32x128xf32>
    %73 = arith.mulf %53, %72 : vector<32x128xf32>
    %74 = vector.extract_strided_slice %71 {offsets = [32, 0], sizes = [32, 128], strides = [1, 1]} : vector<64x128xf32> to vector<32x128xf32>
    %75 = arith.addf %73, %74 : vector<32x128xf32>
    %cst_40 = arith.constant 0.000000e+00 : f32
    %76 = vector.broadcast %cst_40 : f32 to vector<32x128xf32>
    %77 = arith.maximumf %75, %76 : vector<32x128xf32>
    %c1_i32_41 = arith.constant 1 : i32
    %78 = tpu.dynamic_rotate %77 by %c1_i32_41 dim 1 : vector<32x128xf32>, i32 -> vector<32x128xf32>
    %79 = vector.broadcast %5 : vector<1x128xf32> to vector<32x128xf32>
    %80 = arith.mulf %78, %79 : vector<32x128xf32>
    %c0_42 = arith.constant 0 : index
    %c0_43 = arith.constant 0 : index
    %81 = vector.load %arg9[%c0_42, %c0_43] : memref<96x128xf32, #tpu.memory_space<vmem>>, vector<32x128xf32>
    tpu.vector_store %arg9[%c0_42, %c0_43], %80 {strides = array<i32>} : memref<96x128xf32, #tpu.memory_space<vmem>>, vector<32x128xf32>,
    %c32_44 = arith.constant 32 : index
    %c0_45 = arith.constant 0 : index
    %82 = vector.load %arg9[%c32_44, %c0_45] : memref<96x128xf32, #tpu.memory_space<vmem>>, vector<32x128xf32>
    tpu.vector_store %arg9[%c32_44, %c0_45], %77 {strides = array<i32>} : memref<96x128xf32, #tpu.memory_space<vmem>>, vector<32x128xf32>,
    %c127_i32_46 = arith.constant 127 : i32
    %83 = tpu.dynamic_rotate %77 by %c127_i32_46 dim 1 : vector<32x128xf32>, i32 -> vector<32x128xf32>
    %84 = vector.broadcast %6 : vector<1x128xf32> to vector<32x128xf32>
    %85 = arith.mulf %83, %84 : vector<32x128xf32>
    %c64_47 = arith.constant 64 : index
    %c0_48 = arith.constant 0 : index
    %86 = vector.load %arg9[%c64_47, %c0_48] : memref<96x128xf32, #tpu.memory_space<vmem>>, vector<32x128xf32>
    tpu.vector_store %arg9[%c64_47, %c0_48], %85 {strides = array<i32>} : memref<96x128xf32, #tpu.memory_space<vmem>>, vector<32x128xf32>,
    %c0_49 = arith.constant 0 : index
    %c0_50 = arith.constant 0 : index
    %87 = vector.load %arg9[%c0_49, %c0_50] : memref<96x128xf32, #tpu.memory_space<vmem>>, vector<96x128xf32>
    %cst_51 = arith.constant dense<0.000000e+00> : vector<32x128xf32>
    %88 = tpu.matmul %16, %87, %cst_51 {dimension_numbers = #tpu.dot_dimension_numbers<[1], [0], [0], [1], [0, 0, 1, 1], [], []>} : vector<32x96xf32>, vector<96x128xf32>, vector<32x128xf32> -> vector<32x128xf32>
    %89 = vector.broadcast %12 : vector<32x1xf32> to vector<32x128xf32>
    %90 = arith.addf %88, %89 : vector<32x128xf32>
    %91 = arith.addf %90, %1 : vector<32x128xf32>
    %c0_52 = arith.constant 0 : index
    %c0_53 = arith.constant 0 : index
    %c0_54 = arith.constant 0 : index
    %92 = vector.load %arg8[%c0_52, %c0_53, %c0_54] : memref<1x32x128xf32, #tpu.memory_space<vmem>>, vector<1x32x128xf32>
    %93 = vector.shape_cast %92 : vector<1x32x128xf32> to vector<32x128xf32>
    %94 = vector.shape_cast %91 : vector<32x128xf32> to vector<1x32x128xf32>
    tpu.vector_store %arg8[%c0_52, %c0_53, %c0_54], %94 {strides = array<i32>} : memref<1x32x128xf32, #tpu.memory_space<vmem>>, vector<1x32x128xf32>,
    return
  }
  func.func @transform_0(%arg0: i32) -> (i32, i32, i32) {
    %c0_i32 = arith.constant 0 : i32
    %c0_i32_0 = arith.constant 0 : i32
    %c0_i32_1 = arith.constant 0 : i32
    return %arg0, %c0_i32, %c0_i32_0 : i32, i32, i32
  }
  func.func @transform_1(%arg0: i32) -> (i32, i32) {
    %c0_i32 = arith.constant 0 : i32
    %c0_i32_0 = arith.constant 0 : i32
    %c0_i32_1 = arith.constant 0 : i32
    return %c0_i32, %c0_i32_0 : i32, i32
  }
  func.func @transform_2(%arg0: i32) -> (i32, i32, i32) {
    %c0_i32 = arith.constant 0 : i32
    %c0_i32_0 = arith.constant 0 : i32
    %c0_i32_1 = arith.constant 0 : i32
    %c0_i32_2 = arith.constant 0 : i32
    return %c0_i32, %c0_i32_0, %c0_i32_1 : i32, i32, i32
  }
  func.func @transform_3(%arg0: i32) -> (i32, i32) {
    %c0_i32 = arith.constant 0 : i32
    %c0_i32_0 = arith.constant 0 : i32
    %c0_i32_1 = arith.constant 0 : i32
    return %c0_i32, %c0_i32_0 : i32, i32
  }
  func.func @transform_4(%arg0: i32) -> (i32, i32) {
    %c0_i32 = arith.constant 0 : i32
    %c0_i32_0 = arith.constant 0 : i32
    %c0_i32_1 = arith.constant 0 : i32
    return %c0_i32, %c0_i32_0 : i32, i32
  }
  func.func @transform_5(%arg0: i32) -> (i32, i32) {
    %c0_i32 = arith.constant 0 : i32
    %c0_i32_0 = arith.constant 0 : i32
    %c0_i32_1 = arith.constant 0 : i32
    return %c0_i32, %c0_i32_0 : i32, i32
  }
  func.func @transform_6(%arg0: i32) -> (i32, i32) {
    %c0_i32 = arith.constant 0 : i32
    %c0_i32_0 = arith.constant 0 : i32
    %c0_i32_1 = arith.constant 0 : i32
    return %c0_i32, %c0_i32_0 : i32, i32
  }
  func.func @transform_7(%arg0: i32) -> (i32, i32, i32) {
    %c0_i32 = arith.constant 0 : i32
    %c0_i32_0 = arith.constant 0 : i32
    %c0_i32_1 = arith.constant 0 : i32
    return %arg0, %c0_i32, %c0_i32_0 : i32, i32, i32
  }
}

</mosaic_0001>

<llo_original>
// kernel: tpu_custom_call.1
$region0: #{tpu_custom_call.1}
  #allocation0 [shape = 'u32[]', space=smem, size = 0x4, offset = 0x4, fixed_abs, tag = 'smem constant byte address 0x4 - core index']
  #allocation1 [shape = 'u32[144,128]{1,0:T(1,128)}', space=vmem, size = 0x12000, scoped, tag = 'internal scratch']
  #allocation2 [shape = 'f32[96,128]{1,0:T(8,128)}', space=vmem, size = 0xc000, scoped, tag = 'scratch operand']
  %s0 = inlined_call_operand.vmem [shape: f32[2,32,128], index: 0, kind: input, shape index: {}]
  %s1 = inlined_call_operand.vmem [shape: f32[32,8], index: 1, kind: input, shape index: {}]
  %s2 = inlined_call_operand.vmem [shape: f32[2,32,96], index: 2, kind: input, shape index: {}]
  %s3 = inlined_call_operand.vmem [shape: f32[8,128], index: 3, kind: input, shape index: {}]
  %s4 = inlined_call_operand.vmem [shape: f32[128,2], index: 4, kind: input, shape index: {}]
  %s5 = inlined_call_operand.vmem [shape: f32[2,128], index: 5, kind: input, shape index: {}]
  %s6 = inlined_call_operand.hbm [shape: f32[64,64], index: 6, kind: input, shape index: {}]
  %s7 = inlined_call_operand.hbm [shape: f32[2,32,128], index: 7, kind: output, shape index: {}]
  %s8 = sld [smem:[#allocation0]]
  $region65: #{tpu_custom_call.1} parent=0
    _
  %s10 = ssub.s32 1, %s8
  %s11 = scalar_select 0, %s10, %s8
  $region1: #{tpu_custom_call.1} parent=0
    #allocation3 [shape = 'u8[32768]{0}', space=vmem, size = 0x8000, scoped, tag = 'input window, operand 6, single buffered']
    #allocation4 [shape = 's32[2]{0}', space=sflag, size = 0x8, scoped, tag = 'scoped memory for tpu_custom_call.1']
    #allocation5 [shape = 's32[2]{0}', space=sflag, size = 0x8, scoped, tag = 'scoped memory for tpu_custom_call.1']
    #allocation6 [shape = 'u8[32768]{0}', space=vmem, size = 0x8000, scoped, tag = 'output window, operand 0']
    %12 = vsyncpa [#allocation4], 0
    %13 = vsyncpa [#allocation5], 0
    %s14 = scalar_lea.sflag [#allocation5], 1
    %15 = vsyncpa %s14, 0
    loop: start=0, step=1, limit=4
    $region2: #{tpu_custom_call.1} parent=1 // loop_pre_header
      _
    $region3: #{tpu_custom_call.1} parent=1 // loop_header
      %s17 = sphi 0, %s21
      %p18 = scmp.ge.s32.totalorder %s17, 4
      %s27 = sphi 0, %s29
      %s30 = sphi 0, %s27
      %s31 = sphi 0, %s30
      %s47 = sphi 0, %s31
      %s51 = sphi 0, %s51
      %s53 = sphi 0, %s51
      %s54 = sphi 0, %s53
      %s68 = sphi 0, %s54
      %s72 = sphi 0, %s72
      %s74 = sphi 0, %s72
      %s75 = sphi 0, %s74
      %s89 = sphi 0, %s75
      %s93 = sphi 0, %s93
      %s95 = sphi 0, %s93
      %s96 = sphi 0, %s95
      %s110 = sphi 0, %s96
      %s114 = sphi 0, %s114
      %s116 = sphi 0, %s114
      %s117 = sphi 0, %s116
      %s131 = sphi 0, %s117
      %s135 = sphi 0, %s135
      %s137 = sphi 0, %s135
      %s138 = sphi 0, %s137
      %s152 = sphi 0, %s138
      %s156 = sphi 0, %s156
      %s158 = sphi 0, %s156
      %s159 = sphi 0, %s158
      %s173 = sphi 0, %s159
      %s179 = sphi 0, %s181
      %s182 = sphi 0, %s179
      %s183 = sphi 0, %s182
      %s199 = sphi 0, %s183
    $region4: #{tpu_custom_call.1} parent=1 // loop_header_branch
      %20 = sbr.rel (%p18) target = $region8
    $region5: #{tpu_custom_call.1} parent=1 // loop_body
      %s22 = ssub.s32 %s17, 1
      %s23 = ssub.s32 %s17, 2
      %s24 = sadd.s32 %s17, 1
      %s25 = ssub.s32 %s17, %s24
      %p26 = scmp.eq.s32.totalorder %s25, 0
      %s28 = sadd.s32 %s27, 1
      %s29 = scalar_select %p26, %s27, %s28
      %p32 = pneg %p26
      %p33 = scmp.eq.s32.totalorder %s17, 1
      %p34 = por %p32, %p33
      %p35 = scmp.ne.s32.totalorder %s27, %s30
      %p36 = scmp.eq.s32.totalorder %s17, 0
      %p37 = por %p35, %p36
      %p38 = scmp.ne.s32.totalorder %s27, %s30
      %p39 = scmp.eq.s32.totalorder %s22, 1
      %p40 = por %p38, %p39
      %p41 = scmp.ne.s32.totalorder %s30, %s31
      %p42 = scmp.eq.s32.totalorder %s22, 0
      %p43 = por %p41, %p42
      %p44 = scmp.ne.s32.totalorder %s30, %s31
      %p45 = scmp.eq.s32.totalorder %s23, 1
      %p46 = por %p44, %p45
      %p48 = scmp.ne.s32.totalorder %s31, %s47
      %p49 = scmp.eq.s32.totalorder %s23, 0
      %p50 = por %p48, %p49
      %s52 = sadd.s32 %s51, 1
      %p55 = scmp.eq.s32.totalorder %s17, 1
      %p56 = scmp.ne.s32.totalorder %s51, %s53
      %p57 = scmp.eq.s32.totalorder %s17, 0
      %p58 = por %p56, %p57
      %p59 = scmp.ne.s32.totalorder %s51, %s53
      %p60 = scmp.eq.s32.totalorder %s22, 1
      %p61 = por %p59, %p60
      %p62 = scmp.ne.s32.totalorder %s53, %s54
      %p63 = scmp.eq.s32.totalorder %s22, 0
      %p64 = por %p62, %p63
      %p65 = scmp.ne.s32.totalorder %s53, %s54
      %p66 = scmp.eq.s32.totalorder %s23, 1
      %p67 = por %p65, %p66
      %p69 = scmp.ne.s32.totalorder %s54, %s68
      %p70 = scmp.eq.s32.totalorder %s23, 0
      %p71 = por %p69, %p70
      %s73 = sadd.s32 %s72, 1
      %p76 = scmp.eq.s32.totalorder %s17, 1
      %p77 = scmp.ne.s32.totalorder %s72, %s74
      %p78 = scmp.eq.s32.totalorder %s17, 0
      %p79 = por %p77, %p78
      %p80 = scmp.ne.s32.totalorder %s72, %s74
      %p81 = scmp.eq.s32.totalorder %s22, 1
      %p82 = por %p80, %p81
      %p83 = scmp.ne.s32.totalorder %s74, %s75
      %p84 = scmp.eq.s32.totalorder %s22, 0
      %p85 = por %p83, %p84
      %p86 = scmp.ne.s32.totalorder %s74, %s75
      %p87 = scmp.eq.s32.totalorder %s23, 1
      %p88 = por %p86, %p87
      %p90 = scmp.ne.s32.totalorder %s75, %s89
      %p91 = scmp.eq.s32.totalorder %s23, 0
      %p92 = por %p90, %p91
      %s94 = sadd.s32 %s93, 1
      %p97 = scmp.eq.s32.totalorder %s17, 1
      %p98 = scmp.ne.s32.totalorder %s93, %s95
      %p99 = scmp.eq.s32.totalorder %s17, 0
      %p100 = por %p98, %p99
      %p101 = scmp.ne.s32.totalorder %s93, %s95
      %p102 = scmp.eq.s32.totalorder %s22, 1
      %p103 = por %p101, %p102
      %p104 = scmp.ne.s32.totalorder %s95, %s96
      %p105 = scmp.eq.s32.totalorder %s22, 0
      %p106 = por %p104, %p105
      %p107 = scmp.ne.s32.totalorder %s95, %s96
      %p108 = scmp.eq.s32.totalorder %s23, 1
      %p109 = por %p107, %p108
      %p111 = scmp.ne.s32.totalorder %s96, %s110
      %p112 = scmp.eq.s32.totalorder %s23, 0
      %p113 = por %p111, %p112
      %s115 = sadd.s32 %s114, 1
      %p118 = scmp.eq.s32.totalorder %s17, 1
      %p119 = scmp.ne.s32.totalorder %s114, %s116
      %p120 = scmp.eq.s32.totalorder %s17, 0
      %p121 = por %p119, %p120
      %p122 = scmp.ne.s32.totalorder %s114, %s116
      %p123 = scmp.eq.s32.totalorder %s22, 1
      %p124 = por %p122, %p123
      %p125 = scmp.ne.s32.totalorder %s116, %s117
      %p126 = scmp.eq.s32.totalorder %s22, 0
      %p127 = por %p125, %p126
      %p128 = scmp.ne.s32.totalorder %s116, %s117
      %p129 = scmp.eq.s32.totalorder %s23, 1
      %p130 = por %p128, %p129
      %p132 = scmp.ne.s32.totalorder %s117, %s131
      %p133 = scmp.eq.s32.totalorder %s23, 0
      %p134 = por %p132, %p133
      %s136 = sadd.s32 %s135, 1
      %p139 = scmp.eq.s32.totalorder %s17, 1
      %p140 = scmp.ne.s32.totalorder %s135, %s137
      %p141 = scmp.eq.s32.totalorder %s17, 0
      %p142 = por %p140, %p141
      %p143 = scmp.ne.s32.totalorder %s135, %s137
      %p144 = scmp.eq.s32.totalorder %s22, 1
      %p145 = por %p143, %p144
      %p146 = scmp.ne.s32.totalorder %s137, %s138
      %p147 = scmp.eq.s32.totalorder %s22, 0
      %p148 = por %p146, %p147
      %p149 = scmp.ne.s32.totalorder %s137, %s138
      %p150 = scmp.eq.s32.totalorder %s23, 1
      %p151 = por %p149, %p150
      %p153 = scmp.ne.s32.totalorder %s138, %s152
      %p154 = scmp.eq.s32.totalorder %s23, 0
      %p155 = por %p153, %p154
      %s157 = sadd.s32 %s156, 1
      %p160 = scmp.eq.s32.totalorder %s17, 1
      %p161 = scmp.ne.s32.totalorder %s156, %s158
      %p162 = scmp.eq.s32.totalorder %s17, 0
      %p163 = por %p161, %p162
      %p164 = scmp.ne.s32.totalorder %s156, %s158
      %p165 = scmp.eq.s32.totalorder %s22, 1
      %p166 = por %p164, %p165
      %p167 = scmp.ne.s32.totalorder %s158, %s159
      %p168 = scmp.eq.s32.totalorder %s22, 0
      %p169 = por %p167, %p168
      %p170 = scmp.ne.s32.totalorder %s158, %s159
      %p171 = scmp.eq.s32.totalorder %s23, 1
      %p172 = por %p170, %p171
      %p174 = scmp.ne.s32.totalorder %s159, %s173
      %p175 = scmp.eq.s32.totalorder %s23, 0
      %p176 = por %p174, %p175
      %s177 = ssub.s32 %s17, %s24
      %p178 = scmp.eq.s32.totalorder %s177, 0
      %s180 = sadd.s32 %s179, 1
      %s181 = scalar_select %p178, %s179, %s180
      %p184 = pneg %p178
      %p185 = scmp.eq.s32.totalorder %s17, 1
      %p186 = por %p184, %p185
      %p187 = scmp.ne.s32.totalorder %s179, %s182
      %p188 = scmp.eq.s32.totalorder %s17, 0
      %p189 = por %p187, %p188
      %p190 = scmp.ne.s32.totalorder %s179, %s182
      %p191 = scmp.eq.s32.totalorder %s22, 1
      %p192 = por %p190, %p191
      %p193 = scmp.ne.s32.totalorder %s182, %s183
      %p194 = scmp.eq.s32.totalorder %s22, 0
      %p195 = por %p193, %p194
      %p196 = scmp.ne.s32.totalorder %s182, %s183
      %p197 = scmp.eq.s32.totalorder %s23, 1
      %p198 = por %p196, %p197
      %p200 = scmp.ne.s32.totalorder %s183, %s199
      %p201 = scmp.eq.s32.totalorder %s23, 0
      %p202 = por %p200, %p201
      %p203 = scmp.le.s32.totalorder 1, %s17
      %p204 = scmp.lt.s32.totalorder %s17, 3
      %p205 = pnand %p203, %p204
      %p206 = pneg %p205
      // Predicated region
      $region9: #{tpu_custom_call.1} parent=5 // pred_check
        _
      $region10: #{tpu_custom_call.1} parent=5 // pred_check_branch
        %208 = sbr.rel (%p205) target = $region12
      $region11: #{tpu_custom_call.1} parent=5 // pred_region
        %s209 = ssub.s32 %s17, 1
        // Predicated region
        $region13: #{tpu_custom_call.1} parent=11 // pred_check
          %p210 = pneg %p64
        $region14: #{tpu_custom_call.1} parent=11 // pred_check_branch
          %212 = sbr.rel (%p210) target = $region16
        $region15: #{tpu_custom_call.1} parent=11 // pred_region
          _
        $region16: #{tpu_custom_call.1} parent=11 // pred_fallthru
          _
        // Predicated region
        $region17: #{tpu_custom_call.1} parent=11 // pred_check
          %p213 = pneg %p85
        $region18: #{tpu_custom_call.1} parent=11 // pred_check_branch
          %215 = sbr.rel (%p213) target = $region20
        $region19: #{tpu_custom_call.1} parent=11 // pred_region
          _
        $region20: #{tpu_custom_call.1} parent=11 // pred_fallthru
          _
        // Predicated region
        $region21: #{tpu_custom_call.1} parent=11 // pred_check
          %p216 = pneg %p106
        $region22: #{tpu_custom_call.1} parent=11 // pred_check_branch
          %218 = sbr.rel (%p216) target = $region24
        $region23: #{tpu_custom_call.1} parent=11 // pred_region
          _
        $region24: #{tpu_custom_call.1} parent=11 // pred_fallthru
          _
        // Predicated region
        $region25: #{tpu_custom_call.1} parent=11 // pred_check
          %p219 = pneg %p127
        $region26: #{tpu_custom_call.1} parent=11 // pred_check_branch
          %221 = sbr.rel (%p219) target = $region28
        $region27: #{tpu_custom_call.1} parent=11 // pred_region
          _
        $region28: #{tpu_custom_call.1} parent=11 // pred_fallthru
          _
        // Predicated region
        $region29: #{tpu_custom_call.1} parent=11 // pred_check
          %p222 = pneg %p148
        $region30: #{tpu_custom_call.1} parent=11 // pred_check_branch
          %224 = sbr.rel (%p222) target = $region32
        $region31: #{tpu_custom_call.1} parent=11 // pred_region
          _
        $region32: #{tpu_custom_call.1} parent=11 // pred_fallthru
          _
        // Predicated region
        $region33: #{tpu_custom_call.1} parent=11 // pred_check
          %p225 = pneg %p169
        $region34: #{tpu_custom_call.1} parent=11 // pred_check_branch
          %227 = sbr.rel (%p225) target = $region36
        $region35: #{tpu_custom_call.1} parent=11 // pred_region
          %s229 = ssub.s32 1024, 1024
          %230 = vsyncadd [#allocation4], %s229
          %s231 = sshll.u32 [#allocation3], 4
          %s232 = int_to_ptr.vmem [resolvable:$true] %s231
          %237 = dma.hbm_to_vmem [thread:$0]  %s6, 1024, %s232, [#allocation4], 128, 128, 8
        $region36: #{tpu_custom_call.1} parent=11 // pred_fallthru
          _
      $region12: #{tpu_custom_call.1} parent=5 // pred_fallthru
        _
      %p238 = scmp.lt.s32.totalorder %s17, 2
      // Predicated region
      $region37: #{tpu_custom_call.1} parent=5 // pred_check
        %p239 = pneg %p238
      $region38: #{tpu_custom_call.1} parent=5 // pred_check_branch
        %241 = sbr.rel (%p239) target = $region40
      $region39: #{tpu_custom_call.1} parent=5 // pred_region
        // Predicated region
        $region41: #{tpu_custom_call.1} parent=39 // pred_check
          %p242 = pneg %p37
        $region42: #{tpu_custom_call.1} parent=39 // pred_check_branch
          %244 = sbr.rel (%p242) target = $region44
        $region43: #{tpu_custom_call.1} parent=39 // pred_region
          %p245 = scmp.lt.s32.totalorder %s17, 1
          %s246 = scalar_select %p245, %s17, 1
          %s247 = smul.addr %s246, 4
          %s248 = smul.addr %s247, 8
          %s249 = scalar_lea.vmem %s0, %s248
        $region44: #{tpu_custom_call.1} parent=39 // pred_fallthru
          _
      $region40: #{tpu_custom_call.1} parent=5 // pred_fallthru
        _
      %p250 = scmp.le.s32.totalorder 1, %s17
      %p251 = scmp.lt.s32.totalorder %s17, 3
      %p252 = pnand %p250, %p251
      %p253 = pneg %p252
      // Predicated region
      $region45: #{tpu_custom_call.1} parent=5 // pred_check
        _
      $region46: #{tpu_custom_call.1} parent=5 // pred_check_branch
        %255 = sbr.rel (%p252) target = $region48
      $region47: #{tpu_custom_call.1} parent=5 // pred_region
        %s256 = ssub.s32 %s17, 1
        // Predicated region
        $region49: #{tpu_custom_call.1} parent=47 // pred_check
          %p257 = pneg %p169
        $region50: #{tpu_custom_call.1} parent=47 // pred_check_branch
          %259 = sbr.rel (%p257) target = $region52
        $region51: #{tpu_custom_call.1} parent=47 // pred_region
          %260 = dma.done [#allocation4], 1024
        $region52: #{tpu_custom_call.1} parent=47 // pred_fallthru
          _
        %p261 = scmp.lt.s32.totalorder %s22, 1
        %s262 = scalar_select %p261, %s22, 1
        %s263 = smul.addr %s262, 4
        %s264 = smul.addr %s263, 8
        %s265 = scalar_lea.vmem %s0, %s264
        %p266 = pneg %p43
        %p267 = pneg %p40
        %p268 = pneg %p64
        %p269 = pneg %p61
        %p270 = pneg %p85
        %p271 = pneg %p82
        %p272 = pneg %p106
        %p273 = pneg %p103
        %p274 = pneg %p127
        %p275 = pneg %p124
        %p276 = pneg %p148
        %p277 = pneg %p145
        %p278 = pneg %p169
        %p279 = pneg %p166
        %p280 = pneg %p195
        %p281 = pneg %p192
        %s282 = sand.u32 %s182, 1
        %s283 = scalar_lea.sflag [#allocation5], %s282
        %s284 = sand.u32 %s182, 1
        %s285 = smul.addr %s284, 32
        %s286 = scalar_lea.vmem [#allocation6], %s285
        %p287 = scmp.lt.s32.totalorder %s22, 1
        %s288 = scalar_select %p287, %s22, 1
        %s289 = smul.addr %s288, 4
        %s290 = smul.addr %s289, 8
        %s291 = scalar_lea.vmem %s0, %s290
        %v292 = vld [vmem:[%s291] sm:$0xff]
        %v293 = vld [vmem:[%s291 + $0x8] sm:$0xff]
        %v294 = vld [vmem:[%s291 + $0x10] sm:$0xff]
        %v295 = vld [vmem:[%s291 + $0x18] sm:$0xff]
        %v296 = vld [vmem:[%s4] sm:$0xff]
        %v297 = vld [vmem:[%s4 + $0x8] sm:$0xff]
        %v298 = vld [vmem:[%s4 + $0x10] sm:$0xff]
        %v299 = vld [vmem:[%s4 + $0x18] sm:$0xff]
        %v300 = vld [vmem:[%s4 + $0x20] sm:$0xff]
        %v301 = vld [vmem:[%s4 + $0x28] sm:$0xff]
        %v302 = vld [vmem:[%s4 + $0x30] sm:$0xff]
        %v303 = vld [vmem:[%s4 + $0x38] sm:$0xff]
        %v304 = vld [vmem:[%s4 + $0x40] sm:$0xff]
        %v305 = vld [vmem:[%s4 + $0x48] sm:$0xff]
        %v306 = vld [vmem:[%s4 + $0x50] sm:$0xff]
        %v307 = vld [vmem:[%s4 + $0x58] sm:$0xff]
        %v308 = vld [vmem:[%s4 + $0x60] sm:$0xff]
        %v309 = vld [vmem:[%s4 + $0x68] sm:$0xff]
        %v310 = vld [vmem:[%s4 + $0x70] sm:$0xff]
        %v311 = vld [vmem:[%s4 + $0x78] sm:$0xff]
        %v312 = vld [vmem:[%s5] sm:$0x3]
        %v313 = vld [vmem:[#allocation3] sm:$0xff]
        %v314 = vld [vmem:[#allocation3 + $0x8] sm:$0xff]
        %v315 = vld [vmem:[#allocation3 + $0x10] sm:$0xff]
        %v316 = vld [vmem:[#allocation3 + $0x18] sm:$0xff]
        %v317 = vld [vmem:[#allocation3 + $0x20] sm:$0xff]
        %v318 = vld [vmem:[#allocation3 + $0x28] sm:$0xff]
        %v319 = vld [vmem:[#allocation3 + $0x30] sm:$0xff]
        %v320 = vld [vmem:[#allocation3 + $0x38] sm:$0xff]
        %v321 = vld [vmem:[%s3] sm:$0x1]
        %v322 = vld [vmem:[%s3 + $0x1] sm:$0x1]
        %v323 = vld [vmem:[%s1] sm:$0xff]
        %v324 = vld [vmem:[%s1 + $0x8] sm:$0xff]
        %v325 = vld [vmem:[%s1 + $0x10] sm:$0xff]
        %v326 = vld [vmem:[%s1 + $0x18] sm:$0xff]
        %v327 = vld [vmem:[%s2] sm:$0xff]
        %v328 = vld [vmem:[%s2 + $0x8] sm:$0xff]
        %v329 = vld [vmem:[%s2 + $0x10] sm:$0xff]
        %v330 = vld [vmem:[%s2 + $0x18] sm:$0xff]
        %s331 = scalar_lea.vmem %s2, 32
        %v332 = vld [vmem:[%s331] sm:$0xff]
        %v333 = vld [vmem:[%s331 + $0x8] sm:$0xff]
        %v334 = vld [vmem:[%s331 + $0x10] sm:$0xff]
        %v335 = vld [vmem:[%s331 + $0x18] sm:$0xff]
        %v336 = vmul.f32 %v292, %v292
        %v337 = vmul.f32 %v293, %v293
        %v338 = vmul.f32 %v294, %v294
        %v339 = vmul.f32 %v295, %v295
        %340 = vmatprep.subr.mxu0 0.0
        %341 = vmatpush1.msra.mxu0 %v311
        %342 = vmatprep.subr.mxu0 0.0
        %343 = vmatpush1.msra.mxu0 %v310
        %344 = vmatprep.subr.mxu0 0.0
        %345 = vmatpush1.msra.mxu0 %v309
        %346 = vmatprep.subr.mxu0 0.0
        %347 = vmatpush1.msra.mxu0 %v308
        %348 = vmatprep.subr.mxu0 0.0
        %349 = vmatpush1.msra.mxu0 %v307
        %350 = vmatprep.subr.mxu0 0.0
        %351 = vmatpush1.msra.mxu0 %v306
        %352 = vmatprep.subr.mxu0 0.0
        %353 = vmatpush1.msra.mxu0 %v305
        %354 = vmatprep.subr.mxu0 0.0
        %355 = vmatpush1.msra.mxu0 %v304
        %356 = vmatprep.subr.mxu0 0.0
        %357 = vmatpush1.msra.mxu0 %v303
        %358 = vmatprep.subr.mxu0 0.0
        %359 = vmatpush1.msra.mxu0 %v302
        %360 = vmatprep.subr.mxu0 0.0
        %361 = vmatpush1.msra.mxu0 %v301
        %362 = vmatprep.subr.mxu0 0.0
        %363 = vmatpush1.msra.mxu0 %v300
        %364 = vmatprep.subr.mxu0 0.0
        %365 = vmatpush1.msra.mxu0 %v299
        %366 = vmatprep.subr.mxu0 0.0
        %367 = vmatpush1.msra.mxu0 %v298
        %368 = vmatprep.subr.mxu0 0.0
        %369 = vmatpush1.msra.mxu0 %v297
        %370 = vmatprep.subr.mxu0 0.0
        %371 = vmatpush1.msra.mxu0 %v296
        %372 = vmatprep.subr.mxu0 0.0
        %373 = vmatpush2.msra.mxu0 0.0
        %374 = vmatprep.subr.mxu0 0.0
        %375 = vmatpush2.msra.mxu0 0.0
        %376 = vmatprep.subr.mxu0 0.0
        %377 = vmatpush2.msra.mxu0 0.0
        %378 = vmatprep.subr.mxu0 0.0
        %379 = vmatpush2.msra.mxu0 0.0
        %380 = vmatprep.subr.mxu0 0.0
        %381 = vmatpush2.msra.mxu0 0.0
        %382 = vmatprep.subr.mxu0 0.0
        %383 = vmatpush2.msra.mxu0 0.0
        %384 = vmatprep.subr.mxu0 0.0
        %385 = vmatpush2.msra.mxu0 0.0
        %386 = vmatprep.subr.mxu0 0.0
        %387 = vmatpush2.msra.mxu0 0.0
        %388 = vmatprep.subr.mxu0 0.0
        %389 = vmatpush2.msra.mxu0 0.0
        %390 = vmatprep.subr.mxu0 0.0
        %391 = vmatpush2.msra.mxu0 0.0
        %392 = vmatprep.subr.mxu0 0.0
        %393 = vmatpush2.msra.mxu0 0.0
        %394 = vmatprep.subr.mxu0 0.0
        %395 = vmatpush2.msra.mxu0 0.0
        %396 = vmatprep.subr.mxu0 0.0
        %397 = vmatpush2.msra.mxu0 0.0
        %398 = vmatprep.subr.mxu0 0.0
        %399 = vmatpush2.msra.mxu0 0.0
        %400 = vmatprep.subr.mxu0 0.0
        %401 = vmatpush2.msra.mxu0 0.0
        %402 = vmatprep.subr.mxu0 0.0
        %403 = vmatpush2.msra.mxu0 0.0
        %404 = vmatprep.mubr.f32.mxu0 0.0
        %405 = vmatmul.mubr.f32.gmra.mxu0 %v292
        %v406 = vpop.f32.mrf.mxu0
        %v407 = vadd.f32 0.0, %v406
        %v408 = vpop.f32.mrf.mxu0
        %409 = vmatprep.mubr.f32.mxu0 0.0
        %410 = vmatmul.mubr.f32.gmra.mxu0 %v293
        %v411 = vpop.f32.mrf.mxu0
        %v412 = vadd.f32 0.0, %v411
        %v413 = vpop.f32.mrf.mxu0
        %414 = vmatprep.mubr.f32.mxu0 0.0
        %415 = vmatmul.mubr.f32.gmra.mxu0 %v294
        %v416 = vpop.f32.mrf.mxu0
        %v417 = vadd.f32 0.0, %v416
        %v418 = vpop.f32.mrf.mxu0
        %419 = vmatprep.mubr.f32.mxu0 0.0
        %420 = vmatmul.mubr.f32.gmra.mxu0 %v295
        %v421 = vpop.f32.mrf.mxu0
        %v422 = vadd.f32 0.0, %v421
        %v423 = vpop.f32.mrf.mxu0
        %424 = vmatprep.mubr.f32.mxu0 0.0
        %425 = vmatmul.mubr.f32.gmra.mxu0 %v336
        %v426 = vpop.f32.mrf.mxu0
        %v427 = vadd.f32 0.0, %v426
        %v428 = vpop.f32.mrf.mxu0
        %429 = vmatprep.mubr.f32.mxu0 0.0
        %430 = vmatmul.mubr.f32.gmra.mxu0 %v337
        %v431 = vpop.f32.mrf.mxu0
        %v432 = vadd.f32 0.0, %v431
        %v433 = vpop.f32.mrf.mxu0
        %434 = vmatprep.mubr.f32.mxu0 0.0
        %435 = vmatmul.mubr.f32.gmra.mxu0 %v338
        %v436 = vpop.f32.mrf.mxu0
        %v437 = vadd.f32 0.0, %v436
        %v438 = vpop.f32.mrf.mxu0
        %439 = vmatprep.mubr.f32.mxu0 0.0
        %440 = vmatmul.mubr.f32.gmra.mxu0 %v339
        %v441 = vpop.f32.mrf.mxu0
        %v442 = vadd.f32 0.0, %v441
        %v443 = vpop.f32.mrf.mxu0
        %444 = vdwg.mxu0
        %vm445 = vcmask 523264
        %v447 = vsel %vm445, %v313, 0
        %v450 = vsel %vm445, %v314, 0
        %v453 = vsel %vm445, %v315, 0
        %v456 = vsel %vm445, %v316, 0
        %v459 = vsel %vm445, %v317, 0
        %v462 = vsel %vm445, %v318, 0
        %v465 = vsel %vm445, %v319, 0
        %v468 = vsel %vm445, %v320, 0
        %470 = vmatprep.subr.mxu0 0.0
        %471 = vmatpush1.msra.mxu0 0.0
        %472 = vmatprep.subr.mxu0 0.0
        %473 = vmatpush1.msra.mxu0 0.0
        %474 = vmatprep.subr.mxu0 0.0
        %475 = vmatpush1.msra.mxu0 0.0
        %476 = vmatprep.subr.mxu0 0.0
        %477 = vmatpush1.msra.mxu0 0.0
        %478 = vmatprep.subr.mxu0 0.0
        %479 = vmatpush1.msra.mxu0 0.0
        %480 = vmatprep.subr.mxu0 0.0
        %481 = vmatpush1.msra.mxu0 0.0
        %482 = vmatprep.subr.mxu0 0.0
        %483 = vmatpush1.msra.mxu0 0.0
        %484 = vmatprep.subr.mxu0 0.0
        %485 = vmatpush1.msra.mxu0 0.0
        %486 = vmatprep.subr.mxu0 0.0
        %487 = vmatpush1.msra.mxu0 %v442
        %488 = vmatprep.subr.mxu0 0.0
        %489 = vmatpush1.msra.mxu0 %v437
        %490 = vmatprep.subr.mxu0 0.0
        %491 = vmatpush1.msra.mxu0 %v432
        %492 = vmatprep.subr.mxu0 0.0
        %493 = vmatpush1.msra.mxu0 %v427
        %494 = vmatprep.subr.mxu0 0.0
        %495 = vmatpush1.msra.mxu0 %v422
        %496 = vmatprep.subr.mxu0 0.0
        %497 = vmatpush1.msra.mxu0 %v417
        %498 = vmatprep.subr.mxu0 0.0
        %499 = vmatpush1.msra.mxu0 %v412
        %500 = vmatprep.subr.mxu0 0.0
        %501 = vmatpush1.msra.mxu0 %v407
        %502 = vmatprep.subr.mxu0 0.0
        %503 = vmatpush2.msra.mxu0 0.0
        %504 = vmatprep.subr.mxu0 0.0
        %505 = vmatpush2.msra.mxu0 0.0
        %506 = vmatprep.subr.mxu0 0.0
        %507 = vmatpush2.msra.mxu0 0.0
        %508 = vmatprep.subr.mxu0 0.0
        %509 = vmatpush2.msra.mxu0 0.0
        %510 = vmatprep.subr.mxu0 0.0
        %511 = vmatpush2.msra.mxu0 0.0
        %512 = vmatprep.subr.mxu0 0.0
        %513 = vmatpush2.msra.mxu0 0.0
        %514 = vmatprep.subr.mxu0 0.0
        %515 = vmatpush2.msra.mxu0 0.0
        %516 = vmatprep.subr.mxu0 0.0
        %517 = vmatpush2.msra.mxu0 0.0
        %518 = vmatprep.subr.mxu0 0.0
        %519 = vmatpush2.msra.mxu0 0.0
        %520 = vmatprep.subr.mxu0 0.0
        %521 = vmatpush2.msra.mxu0 0.0
        %522 = vmatprep.subr.mxu0 0.0
        %523 = vmatpush2.msra.mxu0 0.0
        %524 = vmatprep.subr.mxu0 0.0
        %525 = vmatpush2.msra.mxu0 0.0
        %526 = vmatprep.subr.mxu0 0.0
        %527 = vmatpush2.msra.mxu0 0.0
        %528 = vmatprep.subr.mxu0 0.0
        %529 = vmatpush2.msra.mxu0 0.0
        %530 = vmatprep.subr.mxu0 0.0
        %531 = vmatpush2.msra.mxu0 0.0
        %532 = vmatprep.subr.mxu0 0.0
        %533 = vmatpush2.msra.mxu0 0.0
        %534 = vmatprep.mubr.f32.mxu0 0.0
        %535 = vmatmul.mubr.f32.gmra.mxu0 %v447
        %v536 = vpop.f32.mrf.mxu0
        %v537 = vadd.f32 0.0, %v536
        %v538 = vpop.f32.mrf.mxu0
        %539 = vmatprep.mubr.f32.mxu0 0.0
        %540 = vmatmul.mubr.f32.gmra.mxu0 %v450
        %v541 = vpop.f32.mrf.mxu0
        %v542 = vadd.f32 0.0, %v541
        %v543 = vpop.f32.mrf.mxu0
        %544 = vmatprep.mubr.f32.mxu0 0.0
        %545 = vmatmul.mubr.f32.gmra.mxu0 %v453
        %v546 = vpop.f32.mrf.mxu0
        %v547 = vadd.f32 0.0, %v546
        %v548 = vpop.f32.mrf.mxu0
        %549 = vmatprep.mubr.f32.mxu0 0.0
        %550 = vmatmul.mubr.f32.gmra.mxu0 %v456
        %v551 = vpop.f32.mrf.mxu0
        %v552 = vadd.f32 0.0, %v551
        %v553 = vpop.f32.mrf.mxu0
        %554 = vmatprep.mubr.f32.mxu0 0.0
        %555 = vmatmul.mubr.f32.gmra.mxu0 %v459
        %v556 = vpop.f32.mrf.mxu0
        %v557 = vadd.f32 0.0, %v556
        %v558 = vpop.f32.mrf.mxu0
        %559 = vmatprep.mubr.f32.mxu0 0.0
        %560 = vmatmul.mubr.f32.gmra.mxu0 %v462
        %v561 = vpop.f32.mrf.mxu0
        %v562 = vadd.f32 0.0, %v561
        %v563 = vpop.f32.mrf.mxu0
        %564 = vmatprep.mubr.f32.mxu0 0.0
        %565 = vmatmul.mubr.f32.gmra.mxu0 %v465
        %v566 = vpop.f32.mrf.mxu0
        %v567 = vadd.f32 0.0, %v566
        %v568 = vpop.f32.mrf.mxu0
        %569 = vmatprep.mubr.f32.mxu0 0.0
        %570 = vmatmul.mubr.f32.gmra.mxu0 %v468
        %v571 = vpop.f32.mrf.mxu0
        %v572 = vadd.f32 0.0, %v571
        %v573 = vpop.f32.mrf.mxu0
        %574 = vdwg.mxu0
        %v575 = vmul.f32 %v537, %v537
        %v576 = vmul.f32 %v542, %v542
        %v577 = vmul.f32 %v547, %v547
        %v578 = vmul.f32 %v552, %v552
        %v579 = vsub.f32 %v557, %v575
        %v580 = vsub.f32 %v562, %v576
        %v581 = vsub.f32 %v567, %v577
        %v582 = vsub.f32 %v572, %v578
        %v583 = vadd.f32 %v579, 1e-05
        %v584 = vadd.f32 %v580, 1e-05
        %v585 = vadd.f32 %v581, 1e-05
        %v586 = vadd.f32 %v582, 1e-05
        %v587 = vrsqrt.pop %v583
        %v588 = vrsqrt.pop %v584
        %v589 = vrsqrt.pop %v585
        %v590 = vrsqrt.pop %v586
        %592 = vset.pattern.permute.xlu0 0
        %593 = vperm.xlu0 %592, %v323
        %v594 = vpop.permute.xlu0 %593
        %597 = vset.pattern.permute.xlu0 0
        %598 = vperm.xlu0 %597, %v324
        %v599 = vpop.permute.xlu0 %598
        %602 = vset.pattern.permute.xlu0 0
        %603 = vperm.xlu0 %602, %v325
        %v604 = vpop.permute.xlu0 %603
        %607 = vset.pattern.permute.xlu0 0
        %608 = vperm.xlu0 %607, %v326
        %v609 = vpop.permute.xlu0 %608
        %v611 = vmul.f32 %v587, %v594
        %v612 = vmul.f32 %v588, %v599
        %v613 = vmul.f32 %v589, %v604
        %v614 = vmul.f32 %v590, %v609
        %v615 = vmul.f32 %v537, %v611
        %v616 = vmul.f32 %v542, %v612
        %v617 = vmul.f32 %v547, %v613
        %v618 = vmul.f32 %v552, %v614
        %619 = vset.pattern.permute.xlu0 1
        %620 = vperm.xlu0 %619, %v323
        %v621 = vpop.permute.xlu0 %620
        %623 = vset.pattern.permute.xlu0 1
        %624 = vperm.xlu0 %623, %v324
        %v625 = vpop.permute.xlu0 %624
        %627 = vset.pattern.permute.xlu0 1
        %628 = vperm.xlu0 %627, %v325
        %v629 = vpop.permute.xlu0 %628
        %631 = vset.pattern.permute.xlu0 1
        %632 = vperm.xlu0 %631, %v326
        %v633 = vpop.permute.xlu0 %632
        %v635 = vsub.f32 %v621, %v615
        %v636 = vsub.f32 %v625, %v616
        %v637 = vsub.f32 %v629, %v617
        %v638 = vsub.f32 %v633, %v618
        %vm639 = vcmask 15360
        %v641 = vsel %vm639, %v611, 0
        %v644 = vsel %vm639, %v612, 0
        %v647 = vsel %vm639, %v613, 0
        %v650 = vsel %vm639, %v614, 0
        %v653 = vsel %vm639, %v635, 0
        %v656 = vsel %vm639, %v636, 0
        %v659 = vsel %vm639, %v637, 0
        %v662 = vsel %vm639, %v638, 0
        %vm664 = vcmask 1041408
        %v666 = vsel %vm664, %v312, 0
        %668 = vmatprep.subr.mxu0 0.0
        %669 = vmatpush1.msra.mxu0 0.0
        %670 = vmatprep.subr.mxu0 0.0
        %671 = vmatpush1.msra.mxu0 0.0
        %672 = vmatprep.subr.mxu0 0.0
        %673 = vmatpush1.msra.mxu0 0.0
        %674 = vmatprep.subr.mxu0 0.0
        %675 = vmatpush1.msra.mxu0 0.0
        %676 = vmatprep.subr.mxu0 0.0
        %677 = vmatpush1.msra.mxu0 0.0
        %678 = vmatprep.subr.mxu0 0.0
        %679 = vmatpush1.msra.mxu0 0.0
        %680 = vmatprep.subr.mxu0 0.0
        %681 = vmatpush1.msra.mxu0 0.0
        %682 = vmatprep.subr.mxu0 0.0
        %683 = vmatpush1.msra.mxu0 0.0
        %684 = vmatprep.subr.mxu0 0.0
        %685 = vmatpush1.msra.mxu0 0.0
        %686 = vmatprep.subr.mxu0 0.0
        %687 = vmatpush1.msra.mxu0 0.0
        %688 = vmatprep.subr.mxu0 0.0
        %689 = vmatpush1.msra.mxu0 0.0
        %690 = vmatprep.subr.mxu0 0.0
        %691 = vmatpush1.msra.mxu0 0.0
        %692 = vmatprep.subr.mxu0 0.0
        %693 = vmatpush1.msra.mxu0 0.0
        %694 = vmatprep.subr.mxu0 0.0
        %695 = vmatpush1.msra.mxu0 0.0
        %696 = vmatprep.subr.mxu0 0.0
        %697 = vmatpush1.msra.mxu0 0.0
        %698 = vmatprep.subr.mxu0 0.0
        %699 = vmatpush1.msra.mxu0 %v666
        %700 = vmatprep.subr.mxu0 0.0
        %701 = vmatpush2.msra.mxu0 0.0
        %702 = vmatprep.subr.mxu0 0.0
        %703 = vmatpush2.msra.mxu0 0.0
        %704 = vmatprep.subr.mxu0 0.0
        %705 = vmatpush2.msra.mxu0 0.0
        %706 = vmatprep.subr.mxu0 0.0
        %707 = vmatpush2.msra.mxu0 0.0
        %708 = vmatprep.subr.mxu0 0.0
        %709 = vmatpush2.msra.mxu0 0.0
        %710 = vmatprep.subr.mxu0 0.0
        %711 = vmatpush2.msra.mxu0 0.0
        %712 = vmatprep.subr.mxu0 0.0
        %713 = vmatpush2.msra.mxu0 0.0
        %714 = vmatprep.subr.mxu0 0.0
        %715 = vmatpush2.msra.mxu0 0.0
        %716 = vmatprep.subr.mxu0 0.0
        %717 = vmatpush2.msra.mxu0 0.0
        %718 = vmatprep.subr.mxu0 0.0
        %719 = vmatpush2.msra.mxu0 0.0
        %720 = vmatprep.subr.mxu0 0.0
        %721 = vmatpush2.msra.mxu0 0.0
        %722 = vmatprep.subr.mxu0 0.0
        %723 = vmatpush2.msra.mxu0 0.0
        %724 = vmatprep.subr.mxu0 0.0
        %725 = vmatpush2.msra.mxu0 0.0
        %726 = vmatprep.subr.mxu0 0.0
        %727 = vmatpush2.msra.mxu0 0.0
        %728 = vmatprep.subr.mxu0 0.0
        %729 = vmatpush2.msra.mxu0 0.0
        %730 = vmatprep.subr.mxu0 0.0
        %731 = vmatpush2.msra.mxu0 0.0
        %732 = vmatprep.mubr.f32.mxu0 0.0
        %733 = vmatmul.mubr.f32.gmra.mxu0 %v641
        %v734 = vpop.f32.mrf.mxu0
        %v735 = vadd.f32 0.0, %v734
        %v736 = vpop.f32.mrf.mxu0
        %737 = vmatprep.mubr.f32.mxu0 0.0
        %738 = vmatmul.mubr.f32.gmra.mxu0 %v644
        %v739 = vpop.f32.mrf.mxu0
        %v740 = vadd.f32 0.0, %v739
        %v741 = vpop.f32.mrf.mxu0
        %742 = vmatprep.mubr.f32.mxu0 0.0
        %743 = vmatmul.mubr.f32.gmra.mxu0 %v647
        %v744 = vpop.f32.mrf.mxu0
        %v745 = vadd.f32 0.0, %v744
        %v746 = vpop.f32.mrf.mxu0
        %747 = vmatprep.mubr.f32.mxu0 0.0
        %748 = vmatmul.mubr.f32.gmra.mxu0 %v650
        %v749 = vpop.f32.mrf.mxu0
        %v750 = vadd.f32 0.0, %v749
        %v751 = vpop.f32.mrf.mxu0
        %752 = vmatprep.mubr.f32.mxu0 0.0
        %753 = vmatmul.mubr.f32.gmra.mxu0 %v653
        %v754 = vpop.f32.mrf.mxu0
        %v755 = vadd.f32 0.0, %v754
        %v756 = vpop.f32.mrf.mxu0
        %757 = vmatprep.mubr.f32.mxu0 0.0
        %758 = vmatmul.mubr.f32.gmra.mxu0 %v656
        %v759 = vpop.f32.mrf.mxu0
        %v760 = vadd.f32 0.0, %v759
        %v761 = vpop.f32.mrf.mxu0
        %762 = vmatprep.mubr.f32.mxu0 0.0
        %763 = vmatmul.mubr.f32.gmra.mxu0 %v659
        %v764 = vpop.f32.mrf.mxu0
        %v765 = vadd.f32 0.0, %v764
        %v766 = vpop.f32.mrf.mxu0
        %767 = vmatprep.mubr.f32.mxu0 0.0
        %768 = vmatmul.mubr.f32.gmra.mxu0 %v662
        %v769 = vpop.f32.mrf.mxu0
        %v770 = vadd.f32 0.0, %v769
        %v771 = vpop.f32.mrf.mxu0
        %772 = vdwg.mxu0
        %v773 = vmul.f32 %v292, %v735
        %v774 = vmul.f32 %v293, %v740
        %v775 = vmul.f32 %v294, %v745
        %v776 = vmul.f32 %v295, %v750
        %v777 = vadd.f32 %v773, %v755
        %v778 = vadd.f32 %v774, %v760
        %v779 = vadd.f32 %v775, %v765
        %v780 = vadd.f32 %v776, %v770
        %v781 = vmax.f32 %v777, 0.0
        %v782 = vmax.f32 %v778, 0.0
        %v783 = vmax.f32 %v779, 0.0
        %v784 = vmax.f32 %v780, 0.0
        %785 = vrot.lane.b32.xlu0 %v781, 1
        %v786 = vpop.permute.xlu0 %785
        %787 = vrot.lane.b32.xlu0 %v782, 1
        %v788 = vpop.permute.xlu0 %787
        %789 = vrot.lane.b32.xlu0 %v783, 1
        %v790 = vpop.permute.xlu0 %789
        %791 = vrot.lane.b32.xlu0 %v784, 1
        %v792 = vpop.permute.xlu0 %791
        %v793 = vlaneseq
        %v794 = vshrl.u32 %v793, 7
        %v795 = vsub.s32 0, %v794
        %v796 = vrot.slane %v321, %v795
        %v797 = vmul.f32 %v786, %v796
        %v798 = vmul.f32 %v788, %v796
        %v799 = vmul.f32 %v790, %v796
        %v800 = vmul.f32 %v792, %v796
        %801 = vst [vmem:[#allocation2] sm:$0xff] %v797
        %802 = vst [vmem:[#allocation2 + $0x8] sm:$0xff] %v798
        %803 = vst [vmem:[#allocation2 + $0x10] sm:$0xff] %v799
        %804 = vst [vmem:[#allocation2 + $0x18] sm:$0xff] %v800
        %805 = vst [vmem:[#allocation2 + $0x20] sm:$0xff] %v781
        %806 = vst [vmem:[#allocation2 + $0x28] sm:$0xff] %v782
        %807 = vst [vmem:[#allocation2 + $0x30] sm:$0xff] %v783
        %808 = vst [vmem:[#allocation2 + $0x38] sm:$0xff] %v784
        %809 = vrot.lane.b32.xlu0 %v781, 127
        %v810 = vpop.permute.xlu0 %809
        %811 = vrot.lane.b32.xlu0 %v782, 127
        %v812 = vpop.permute.xlu0 %811
        %813 = vrot.lane.b32.xlu0 %v783, 127
        %v814 = vpop.permute.xlu0 %813
        %815 = vrot.lane.b32.xlu0 %v784, 127
        %v816 = vpop.permute.xlu0 %815
        %v817 = vlaneseq
        %v818 = vshrl.u32 %v817, 7
        %v819 = vsub.s32 0, %v818
        %v820 = vrot.slane %v322, %v819
        %v821 = vmul.f32 %v810, %v820
        %v822 = vmul.f32 %v812, %v820
        %v823 = vmul.f32 %v814, %v820
        %v824 = vmul.f32 %v816, %v820
        %825 = vst [vmem:[#allocation2 + $0x40] sm:$0xff] %v821
        %826 = vst [vmem:[#allocation2 + $0x48] sm:$0xff] %v822
        %827 = vst [vmem:[#allocation2 + $0x50] sm:$0xff] %v823
        %828 = vst [vmem:[#allocation2 + $0x58] sm:$0xff] %v824
        %v829 = vld [vmem:[#allocation2] sm:$0xff]
        %v830 = vld [vmem:[#allocation2 + $0x8] sm:$0xff]
        %v831 = vld [vmem:[#allocation2 + $0x10] sm:$0xff]
        %v832 = vld [vmem:[#allocation2 + $0x18] sm:$0xff]
        %v833 = vld [vmem:[#allocation2 + $0x20] sm:$0xff]
        %v834 = vld [vmem:[#allocation2 + $0x28] sm:$0xff]
        %v835 = vld [vmem:[#allocation2 + $0x30] sm:$0xff]
        %v836 = vld [vmem:[#allocation2 + $0x38] sm:$0xff]
        %v837 = vld [vmem:[#allocation2 + $0x40] sm:$0xff]
        %v838 = vld [vmem:[#allocation2 + $0x48] sm:$0xff]
        %v839 = vld [vmem:[#allocation2 + $0x50] sm:$0xff]
        %v840 = vld [vmem:[#allocation2 + $0x58] sm:$0xff]
        %841 = vset.pattern.permute.xlu0 2
        %842 = vperm.xlu0 %841, %v323
        %v843 = vpop.permute.xlu0 %842
        %845 = vset.pattern.permute.xlu0 2
        %846 = vperm.xlu0 %845, %v324
        %v847 = vpop.permute.xlu0 %846
        %849 = vset.pattern.permute.xlu0 2
        %850 = vperm.xlu0 %849, %v325
        %v851 = vpop.permute.xlu0 %850
        %853 = vset.pattern.permute.xlu0 2
        %854 = vperm.xlu0 %853, %v326
        %v855 = vpop.permute.xlu0 %854
        %vm857 = vcmask 785408
        %v859 = vsel %vm857, %v327, 0
        %v862 = vsel %vm857, %v328, 0
        %v865 = vsel %vm857, %v329, 0
        %v868 = vsel %vm857, %v330, 0
        %870 = vmatprep.subr.mxu0 0.0
        %871 = vmatpush1.msra.mxu0 0.0
        %872 = vmatprep.subr.mxu0 0.0
        %873 = vmatpush1.msra.mxu0 0.0
        %874 = vmatprep.subr.mxu0 0.0
        %875 = vmatpush1.msra.mxu0 0.0
        %876 = vmatprep.subr.mxu0 0.0
        %877 = vmatpush1.msra.mxu0 0.0
        %878 = vmatprep.subr.mxu0 0.0
        %879 = vmatpush1.msra.mxu0 %v840
        %880 = vmatprep.subr.mxu0 0.0
        %881 = vmatpush1.msra.mxu0 %v839
        %882 = vmatprep.subr.mxu0 0.0
        %883 = vmatpush1.msra.mxu0 %v838
        %884 = vmatprep.subr.mxu0 0.0
        %885 = vmatpush1.msra.mxu0 %v837
        %886 = vmatprep.subr.mxu0 0.0
        %887 = vmatpush1.msra.mxu0 %v836
        %888 = vmatprep.subr.mxu0 0.0
        %889 = vmatpush1.msra.mxu0 %v835
        %890 = vmatprep.subr.mxu0 0.0
        %891 = vmatpush1.msra.mxu0 %v834
        %892 = vmatprep.subr.mxu0 0.0
        %893 = vmatpush1.msra.mxu0 %v833
        %894 = vmatprep.subr.mxu0 0.0
        %895 = vmatpush1.msra.mxu0 %v832
        %896 = vmatprep.subr.mxu0 0.0
        %897 = vmatpush1.msra.mxu0 %v831
        %898 = vmatprep.subr.mxu0 0.0
        %899 = vmatpush1.msra.mxu0 %v830
        %900 = vmatprep.subr.mxu0 0.0
        %901 = vmatpush1.msra.mxu0 %v829
        %902 = vmatprep.subr.mxu0 0.0
        %903 = vmatpush2.msra.mxu0 0.0
        %904 = vmatprep.subr.mxu0 0.0
        %905 = vmatpush2.msra.mxu0 0.0
        %906 = vmatprep.subr.mxu0 0.0
        %907 = vmatpush2.msra.mxu0 0.0
        %908 = vmatprep.subr.mxu0 0.0
        %909 = vmatpush2.msra.mxu0 0.0
        %910 = vmatprep.subr.mxu0 0.0
        %911 = vmatpush2.msra.mxu0 0.0
        %912 = vmatprep.subr.mxu0 0.0
        %913 = vmatpush2.msra.mxu0 0.0
        %914 = vmatprep.subr.mxu0 0.0
        %915 = vmatpush2.msra.mxu0 0.0
        %916 = vmatprep.subr.mxu0 0.0
        %917 = vmatpush2.msra.mxu0 0.0
        %918 = vmatprep.subr.mxu0 0.0
        %919 = vmatpush2.msra.mxu0 0.0
        %920 = vmatprep.subr.mxu0 0.0
        %921 = vmatpush2.msra.mxu0 0.0
        %922 = vmatprep.subr.mxu0 0.0
        %923 = vmatpush2.msra.mxu0 0.0
        %924 = vmatprep.subr.mxu0 0.0
        %925 = vmatpush2.msra.mxu0 0.0
        %926 = vmatprep.subr.mxu0 0.0
        %927 = vmatpush2.msra.mxu0 0.0
        %928 = vmatprep.subr.mxu0 0.0
        %929 = vmatpush2.msra.mxu0 0.0
        %930 = vmatprep.subr.mxu0 0.0
        %931 = vmatpush2.msra.mxu0 0.0
        %932 = vmatprep.subr.mxu0 0.0
        %933 = vmatpush2.msra.mxu0 0.0
        %934 = vmatprep.mubr.f32.mxu0 0.0
        %935 = vmatmul.mubr.f32.gmra.mxu0 %v859
        %v936 = vpop.f32.mrf.mxu0
        %v937 = vadd.f32 %v843, %v936
        %v938 = vpop.f32.mrf.mxu0
        %939 = vmatprep.mubr.f32.mxu0 0.0
        %940 = vmatmul.mubr.f32.gmra.mxu0 %v862
        %v941 = vpop.f32.mrf.mxu0
        %v942 = vadd.f32 %v847, %v941
        %v943 = vpop.f32.mrf.mxu0
        %944 = vmatprep.mubr.f32.mxu0 0.0
        %945 = vmatmul.mubr.f32.gmra.mxu0 %v865
        %v946 = vpop.f32.mrf.mxu0
        %v947 = vadd.f32 %v851, %v946
        %v948 = vpop.f32.mrf.mxu0
        %949 = vmatprep.mubr.f32.mxu0 0.0
        %950 = vmatmul.mubr.f32.gmra.mxu0 %v868
        %v951 = vpop.f32.mrf.mxu0
        %v952 = vadd.f32 %v855, %v951
        %v953 = vpop.f32.mrf.mxu0
        %954 = vdwg.mxu0
        %v955 = vmul.f32 %v937, %v937
        %v956 = vmul.f32 %v942, %v942
        %v957 = vmul.f32 %v947, %v947
        %v958 = vmul.f32 %v952, %v952
        %959 = vmatprep.subr.mxu0 0.0
        %960 = vmatpush1.msra.mxu0 %v311
        %961 = vmatprep.subr.mxu0 0.0
        %962 = vmatpush1.msra.mxu0 %v310
        %963 = vmatprep.subr.mxu0 0.0
        %964 = vmatpush1.msra.mxu0 %v309
        %965 = vmatprep.subr.mxu0 0.0
        %966 = vmatpush1.msra.mxu0 %v308
        %967 = vmatprep.subr.mxu0 0.0
        %968 = vmatpush1.msra.mxu0 %v307
        %969 = vmatprep.subr.mxu0 0.0
        %970 = vmatpush1.msra.mxu0 %v306
        %971 = vmatprep.subr.mxu0 0.0
        %972 = vmatpush1.msra.mxu0 %v305
        %973 = vmatprep.subr.mxu0 0.0
        %974 = vmatpush1.msra.mxu0 %v304
        %975 = vmatprep.subr.mxu0 0.0
        %976 = vmatpush1.msra.mxu0 %v303
        %977 = vmatprep.subr.mxu0 0.0
        %978 = vmatpush1.msra.mxu0 %v302
        %979 = vmatprep.subr.mxu0 0.0
        %980 = vmatpush1.msra.mxu0 %v301
        %981 = vmatprep.subr.mxu0 0.0
        %982 = vmatpush1.msra.mxu0 %v300
        %983 = vmatprep.subr.mxu0 0.0
        %984 = vmatpush1.msra.mxu0 %v299
        %985 = vmatprep.subr.mxu0 0.0
        %986 = vmatpush1.msra.mxu0 %v298
        %987 = vmatprep.subr.mxu0 0.0
        %988 = vmatpush1.msra.mxu0 %v297
        %989 = vmatprep.subr.mxu0 0.0
        %990 = vmatpush1.msra.mxu0 %v296
        %991 = vmatprep.subr.mxu0 0.0
        %992 = vmatpush2.msra.mxu0 0.0
        %993 = vmatprep.subr.mxu0 0.0
        %994 = vmatpush2.msra.mxu0 0.0
        %995 = vmatprep.subr.mxu0 0.0
        %996 = vmatpush2.msra.mxu0 0.0
        %997 = vmatprep.subr.mxu0 0.0
        %998 = vmatpush2.msra.mxu0 0.0
        %999 = vmatprep.subr.mxu0 0.0
        %1000 = vmatpush2.msra.mxu0 0.0
        %1001 = vmatprep.subr.mxu0 0.0
        %1002 = vmatpush2.msra.mxu0 0.0
        %1003 = vmatprep.subr.mxu0 0.0
        %1004 = vmatpush2.msra.mxu0 0.0
        %1005 = vmatprep.subr.mxu0 0.0
        %1006 = vmatpush2.msra.mxu0 0.0
        %1007 = vmatprep.subr.mxu0 0.0
        %1008 = vmatpush2.msra.mxu0 0.0
        %1009 = vmatprep.subr.mxu0 0.0
        %1010 = vmatpush2.msra.mxu0 0.0
        %1011 = vmatprep.subr.mxu0 0.0
        %1012 = vmatpush2.msra.mxu0 0.0
        %1013 = vmatprep.subr.mxu0 0.0
        %1014 = vmatpush2.msra.mxu0 0.0
        %1015 = vmatprep.subr.mxu0 0.0
        %1016 = vmatpush2.msra.mxu0 0.0
        %1017 = vmatprep.subr.mxu0 0.0
        %1018 = vmatpush2.msra.mxu0 0.0
        %1019 = vmatprep.subr.mxu0 0.0
        %1020 = vmatpush2.msra.mxu0 0.0
        %1021 = vmatprep.subr.mxu0 0.0
        %1022 = vmatpush2.msra.mxu0 0.0
        %1023 = vmatprep.mubr.f32.mxu0 0.0
        %1024 = vmatmul.mubr.f32.gmra.mxu0 %v937
        %v1025 = vpop.f32.mrf.mxu0
        %v1026 = vadd.f32 0.0, %v1025
        %v1027 = vpop.f32.mrf.mxu0
        %1028 = vmatprep.mubr.f32.mxu0 0.0
        %1029 = vmatmul.mubr.f32.gmra.mxu0 %v942
        %v1030 = vpop.f32.mrf.mxu0
        %v1031 = vadd.f32 0.0, %v1030
        %v1032 = vpop.f32.mrf.mxu0
        %1033 = vmatprep.mubr.f32.mxu0 0.0
        %1034 = vmatmul.mubr.f32.gmra.mxu0 %v947
        %v1035 = vpop.f32.mrf.mxu0
        %v1036 = vadd.f32 0.0, %v1035
        %v1037 = vpop.f32.mrf.mxu0
        %1038 = vmatprep.mubr.f32.mxu0 0.0
        %1039 = vmatmul.mubr.f32.gmra.mxu0 %v952
        %v1040 = vpop.f32.mrf.mxu0
        %v1041 = vadd.f32 0.0, %v1040
        %v1042 = vpop.f32.mrf.mxu0
        %1043 = vmatprep.mubr.f32.mxu0 0.0
        %1044 = vmatmul.mubr.f32.gmra.mxu0 %v955
        %v1045 = vpop.f32.mrf.mxu0
        %v1046 = vadd.f32 0.0, %v1045
        %v1047 = vpop.f32.mrf.mxu0
        %1048 = vmatprep.mubr.f32.mxu0 0.0
        %1049 = vmatmul.mubr.f32.gmra.mxu0 %v956
        %v1050 = vpop.f32.mrf.mxu0
        %v1051 = vadd.f32 0.0, %v1050
        %v1052 = vpop.f32.mrf.mxu0
        %1053 = vmatprep.mubr.f32.mxu0 0.0
        %1054 = vmatmul.mubr.f32.gmra.mxu0 %v957
        %v1055 = vpop.f32.mrf.mxu0
        %v1056 = vadd.f32 0.0, %v1055
        %v1057 = vpop.f32.mrf.mxu0
        %1058 = vmatprep.mubr.f32.mxu0 0.0
        %1059 = vmatmul.mubr.f32.gmra.mxu0 %v958
        %v1060 = vpop.f32.mrf.mxu0
        %v1061 = vadd.f32 0.0, %v1060
        %v1062 = vpop.f32.mrf.mxu0
        %1063 = vdwg.mxu0
        %1064 = vmatprep.subr.mxu0 0.0
        %1065 = vmatpush1.msra.mxu0 0.0
        %1066 = vmatprep.subr.mxu0 0.0
        %1067 = vmatpush1.msra.mxu0 0.0
        %1068 = vmatprep.subr.mxu0 0.0
        %1069 = vmatpush1.msra.mxu0 0.0
        %1070 = vmatprep.subr.mxu0 0.0
        %1071 = vmatpush1.msra.mxu0 0.0
        %1072 = vmatprep.subr.mxu0 0.0
        %1073 = vmatpush1.msra.mxu0 0.0
        %1074 = vmatprep.subr.mxu0 0.0
        %1075 = vmatpush1.msra.mxu0 0.0
        %1076 = vmatprep.subr.mxu0 0.0
        %1077 = vmatpush1.msra.mxu0 0.0
        %1078 = vmatprep.subr.mxu0 0.0
        %1079 = vmatpush1.msra.mxu0 0.0
        %1080 = vmatprep.subr.mxu0 0.0
        %1081 = vmatpush1.msra.mxu0 %v1061
        %1082 = vmatprep.subr.mxu0 0.0
        %1083 = vmatpush1.msra.mxu0 %v1056
        %1084 = vmatprep.subr.mxu0 0.0
        %1085 = vmatpush1.msra.mxu0 %v1051
        %1086 = vmatprep.subr.mxu0 0.0
        %1087 = vmatpush1.msra.mxu0 %v1046
        %1088 = vmatprep.subr.mxu0 0.0
        %1089 = vmatpush1.msra.mxu0 %v1041
        %1090 = vmatprep.subr.mxu0 0.0
        %1091 = vmatpush1.msra.mxu0 %v1036
        %1092 = vmatprep.subr.mxu0 0.0
        %1093 = vmatpush1.msra.mxu0 %v1031
        %1094 = vmatprep.subr.mxu0 0.0
        %1095 = vmatpush1.msra.mxu0 %v1026
        %1096 = vmatprep.subr.mxu0 0.0
        %1097 = vmatpush2.msra.mxu0 0.0
        %1098 = vmatprep.subr.mxu0 0.0
        %1099 = vmatpush2.msra.mxu0 0.0
        %1100 = vmatprep.subr.mxu0 0.0
        %1101 = vmatpush2.msra.mxu0 0.0
        %1102 = vmatprep.subr.mxu0 0.0
        %1103 = vmatpush2.msra.mxu0 0.0
        %1104 = vmatprep.subr.mxu0 0.0
        %1105 = vmatpush2.msra.mxu0 0.0
        %1106 = vmatprep.subr.mxu0 0.0
        %1107 = vmatpush2.msra.mxu0 0.0
        %1108 = vmatprep.subr.mxu0 0.0
        %1109 = vmatpush2.msra.mxu0 0.0
        %1110 = vmatprep.subr.mxu0 0.0
        %1111 = vmatpush2.msra.mxu0 0.0
        %1112 = vmatprep.subr.mxu0 0.0
        %1113 = vmatpush2.msra.mxu0 0.0
        %1114 = vmatprep.subr.mxu0 0.0
        %1115 = vmatpush2.msra.mxu0 0.0
        %1116 = vmatprep.subr.mxu0 0.0
        %1117 = vmatpush2.msra.mxu0 0.0
        %1118 = vmatprep.subr.mxu0 0.0
        %1119 = vmatpush2.msra.mxu0 0.0
        %1120 = vmatprep.subr.mxu0 0.0
        %1121 = vmatpush2.msra.mxu0 0.0
        %1122 = vmatprep.subr.mxu0 0.0
        %1123 = vmatpush2.msra.mxu0 0.0
        %1124 = vmatprep.subr.mxu0 0.0
        %1125 = vmatpush2.msra.mxu0 0.0
        %1126 = vmatprep.subr.mxu0 0.0
        %1127 = vmatpush2.msra.mxu0 0.0
        %1128 = vmatprep.mubr.f32.mxu0 0.0
        %1129 = vmatmul.mubr.f32.gmra.mxu0 %v447
        %v1130 = vpop.f32.mrf.mxu0
        %v1131 = vadd.f32 0.0, %v1130
        %v1132 = vpop.f32.mrf.mxu0
        %1133 = vmatprep.mubr.f32.mxu0 0.0
        %1134 = vmatmul.mubr.f32.gmra.mxu0 %v450
        %v1135 = vpop.f32.mrf.mxu0
        %v1136 = vadd.f32 0.0, %v1135
        %v1137 = vpop.f32.mrf.mxu0
        %1138 = vmatprep.mubr.f32.mxu0 0.0
        %1139 = vmatmul.mubr.f32.gmra.mxu0 %v453
        %v1140 = vpop.f32.mrf.mxu0
        %v1141 = vadd.f32 0.0, %v1140
        %v1142 = vpop.f32.mrf.mxu0
        %1143 = vmatprep.mubr.f32.mxu0 0.0
        %1144 = vmatmul.mubr.f32.gmra.mxu0 %v456
        %v1145 = vpop.f32.mrf.mxu0
        %v1146 = vadd.f32 0.0, %v1145
        %v1147 = vpop.f32.mrf.mxu0
        %1148 = vmatprep.mubr.f32.mxu0 0.0
        %1149 = vmatmul.mubr.f32.gmra.mxu0 %v459
        %v1150 = vpop.f32.mrf.mxu0
        %v1151 = vadd.f32 0.0, %v1150
        %v1152 = vpop.f32.mrf.mxu0
        %1153 = vmatprep.mubr.f32.mxu0 0.0
        %1154 = vmatmul.mubr.f32.gmra.mxu0 %v462
        %v1155 = vpop.f32.mrf.mxu0
        %v1156 = vadd.f32 0.0, %v1155
        %v1157 = vpop.f32.mrf.mxu0
        %1158 = vmatprep.mubr.f32.mxu0 0.0
        %1159 = vmatmul.mubr.f32.gmra.mxu0 %v465
        %v1160 = vpop.f32.mrf.mxu0
        %v1161 = vadd.f32 0.0, %v1160
        %v1162 = vpop.f32.mrf.mxu0
        %1163 = vmatprep.mubr.f32.mxu0 0.0
        %1164 = vmatmul.mubr.f32.gmra.mxu0 %v468
        %v1165 = vpop.f32.mrf.mxu0
        %v1166 = vadd.f32 0.0, %v1165
        %v1167 = vpop.f32.mrf.mxu0
        %1168 = vdwg.mxu0
        %v1169 = vmul.f32 %v1131, %v1131
        %v1170 = vmul.f32 %v1136, %v1136
        %v1171 = vmul.f32 %v1141, %v1141
        %v1172 = vmul.f32 %v1146, %v1146
        %v1173 = vsub.f32 %v1151, %v1169
        %v1174 = vsub.f32 %v1156, %v1170
        %v1175 = vsub.f32 %v1161, %v1171
        %v1176 = vsub.f32 %v1166, %v1172
        %v1177 = vadd.f32 %v1173, 1e-05
        %v1178 = vadd.f32 %v1174, 1e-05
        %v1179 = vadd.f32 %v1175, 1e-05
        %v1180 = vadd.f32 %v1176, 1e-05
        %v1181 = vrsqrt.pop %v1177
        %v1182 = vrsqrt.pop %v1178
        %v1183 = vrsqrt.pop %v1179
        %v1184 = vrsqrt.pop %v1180
        %1185 = vset.pattern.permute.xlu0 3
        %1186 = vperm.xlu0 %1185, %v323
        %v1187 = vpop.permute.xlu0 %1186
        %1189 = vset.pattern.permute.xlu0 3
        %1190 = vperm.xlu0 %1189, %v324
        %v1191 = vpop.permute.xlu0 %1190
        %1193 = vset.pattern.permute.xlu0 3
        %1194 = vperm.xlu0 %1193, %v325
        %v1195 = vpop.permute.xlu0 %1194
        %1197 = vset.pattern.permute.xlu0 3
        %1198 = vperm.xlu0 %1197, %v326
        %v1199 = vpop.permute.xlu0 %1198
        %v1201 = vmul.f32 %v1181, %v1187
        %v1202 = vmul.f32 %v1182, %v1191
        %v1203 = vmul.f32 %v1183, %v1195
        %v1204 = vmul.f32 %v1184, %v1199
        %v1205 = vmul.f32 %v1131, %v1201
        %v1206 = vmul.f32 %v1136, %v1202
        %v1207 = vmul.f32 %v1141, %v1203
        %v1208 = vmul.f32 %v1146, %v1204
        %1209 = vset.pattern.permute.xlu0 4
        %1210 = vperm.xlu0 %1209, %v323
        %v1211 = vpop.permute.xlu0 %1210
        %1213 = vset.pattern.permute.xlu0 4
        %1214 = vperm.xlu0 %1213, %v324
        %v1215 = vpop.permute.xlu0 %1214
        %1217 = vset.pattern.permute.xlu0 4
        %1218 = vperm.xlu0 %1217, %v325
        %v1219 = vpop.permute.xlu0 %1218
        %1221 = vset.pattern.permute.xlu0 4
        %1222 = vperm.xlu0 %1221, %v326
        %v1223 = vpop.permute.xlu0 %1222
        %v1225 = vsub.f32 %v1211, %v1205
        %v1226 = vsub.f32 %v1215, %v1206
        %v1227 = vsub.f32 %v1219, %v1207
        %v1228 = vsub.f32 %v1223, %v1208
        %v1230 = vsel %vm639, %v1201, 0
        %v1233 = vsel %vm639, %v1202, 0
        %v1236 = vsel %vm639, %v1203, 0
        %v1239 = vsel %vm639, %v1204, 0
        %v1242 = vsel %vm639, %v1225, 0
        %v1245 = vsel %vm639, %v1226, 0
        %v1248 = vsel %vm639, %v1227, 0
        %v1251 = vsel %vm639, %v1228, 0
        %1253 = vmatprep.subr.mxu0 0.0
        %1254 = vmatpush1.msra.mxu0 0.0
        %1255 = vmatprep.subr.mxu0 0.0
        %1256 = vmatpush1.msra.mxu0 0.0
        %1257 = vmatprep.subr.mxu0 0.0
        %1258 = vmatpush1.msra.mxu0 0.0
        %1259 = vmatprep.subr.mxu0 0.0
        %1260 = vmatpush1.msra.mxu0 0.0
        %1261 = vmatprep.subr.mxu0 0.0
        %1262 = vmatpush1.msra.mxu0 0.0
        %1263 = vmatprep.subr.mxu0 0.0
        %1264 = vmatpush1.msra.mxu0 0.0
        %1265 = vmatprep.subr.mxu0 0.0
        %1266 = vmatpush1.msra.mxu0 0.0
        %1267 = vmatprep.subr.mxu0 0.0
        %1268 = vmatpush1.msra.mxu0 0.0
        %1269 = vmatprep.subr.mxu0 0.0
        %1270 = vmatpush1.msra.mxu0 0.0
        %1271 = vmatprep.subr.mxu0 0.0
        %1272 = vmatpush1.msra.mxu0 0.0
        %1273 = vmatprep.subr.mxu0 0.0
        %1274 = vmatpush1.msra.mxu0 0.0
        %1275 = vmatprep.subr.mxu0 0.0
        %1276 = vmatpush1.msra.mxu0 0.0
        %1277 = vmatprep.subr.mxu0 0.0
        %1278 = vmatpush1.msra.mxu0 0.0
        %1279 = vmatprep.subr.mxu0 0.0
        %1280 = vmatpush1.msra.mxu0 0.0
        %1281 = vmatprep.subr.mxu0 0.0
        %1282 = vmatpush1.msra.mxu0 0.0
        %1283 = vmatprep.subr.mxu0 0.0
        %1284 = vmatpush1.msra.mxu0 %v666
        %1285 = vmatprep.subr.mxu0 0.0
        %1286 = vmatpush2.msra.mxu0 0.0
        %1287 = vmatprep.subr.mxu0 0.0
        %1288 = vmatpush2.msra.mxu0 0.0
        %1289 = vmatprep.subr.mxu0 0.0
        %1290 = vmatpush2.msra.mxu0 0.0
        %1291 = vmatprep.subr.mxu0 0.0
        %1292 = vmatpush2.msra.mxu0 0.0
        %1293 = vmatprep.subr.mxu0 0.0
        %1294 = vmatpush2.msra.mxu0 0.0
        %1295 = vmatprep.subr.mxu0 0.0
        %1296 = vmatpush2.msra.mxu0 0.0
        %1297 = vmatprep.subr.mxu0 0.0
        %1298 = vmatpush2.msra.mxu0 0.0
        %1299 = vmatprep.subr.mxu0 0.0
        %1300 = vmatpush2.msra.mxu0 0.0
        %1301 = vmatprep.subr.mxu0 0.0
        %1302 = vmatpush2.msra.mxu0 0.0
        %1303 = vmatprep.subr.mxu0 0.0
        %1304 = vmatpush2.msra.mxu0 0.0
        %1305 = vmatprep.subr.mxu0 0.0
        %1306 = vmatpush2.msra.mxu0 0.0
        %1307 = vmatprep.subr.mxu0 0.0
        %1308 = vmatpush2.msra.mxu0 0.0
        %1309 = vmatprep.subr.mxu0 0.0
        %1310 = vmatpush2.msra.mxu0 0.0
        %1311 = vmatprep.subr.mxu0 0.0
        %1312 = vmatpush2.msra.mxu0 0.0
        %1313 = vmatprep.subr.mxu0 0.0
        %1314 = vmatpush2.msra.mxu0 0.0
        %1315 = vmatprep.subr.mxu0 0.0
        %1316 = vmatpush2.msra.mxu0 0.0
        %1317 = vmatprep.mubr.f32.mxu0 0.0
        %1318 = vmatmul.mubr.f32.gmra.mxu0 %v1230
        %v1319 = vpop.f32.mrf.mxu0
        %v1320 = vadd.f32 0.0, %v1319
        %v1321 = vpop.f32.mrf.mxu0
        %1322 = vmatprep.mubr.f32.mxu0 0.0
        %1323 = vmatmul.mubr.f32.gmra.mxu0 %v1233
        %v1324 = vpop.f32.mrf.mxu0
        %v1325 = vadd.f32 0.0, %v1324
        %v1326 = vpop.f32.mrf.mxu0
        %1327 = vmatprep.mubr.f32.mxu0 0.0
        %1328 = vmatmul.mubr.f32.gmra.mxu0 %v1236
        %v1329 = vpop.f32.mrf.mxu0
        %v1330 = vadd.f32 0.0, %v1329
        %v1331 = vpop.f32.mrf.mxu0
        %1332 = vmatprep.mubr.f32.mxu0 0.0
        %1333 = vmatmul.mubr.f32.gmra.mxu0 %v1239
        %v1334 = vpop.f32.mrf.mxu0
        %v1335 = vadd.f32 0.0, %v1334
        %v1336 = vpop.f32.mrf.mxu0
        %1337 = vmatprep.mubr.f32.mxu0 0.0
        %1338 = vmatmul.mubr.f32.gmra.mxu0 %v1242
        %v1339 = vpop.f32.mrf.mxu0
        %v1340 = vadd.f32 0.0, %v1339
        %v1341 = vpop.f32.mrf.mxu0
        %1342 = vmatprep.mubr.f32.mxu0 0.0
        %1343 = vmatmul.mubr.f32.gmra.mxu0 %v1245
        %v1344 = vpop.f32.mrf.mxu0
        %v1345 = vadd.f32 0.0, %v1344
        %v1346 = vpop.f32.mrf.mxu0
        %1347 = vmatprep.mubr.f32.mxu0 0.0
        %1348 = vmatmul.mubr.f32.gmra.mxu0 %v1248
        %v1349 = vpop.f32.mrf.mxu0
        %v1350 = vadd.f32 0.0, %v1349
        %v1351 = vpop.f32.mrf.mxu0
        %1352 = vmatprep.mubr.f32.mxu0 0.0
        %1353 = vmatmul.mubr.f32.gmra.mxu0 %v1251
        %v1354 = vpop.f32.mrf.mxu0
        %v1355 = vadd.f32 0.0, %v1354
        %v1356 = vpop.f32.mrf.mxu0
        %1357 = vdwg.mxu0
        %v1358 = vmul.f32 %v937, %v1320
        %v1359 = vmul.f32 %v942, %v1325
        %v1360 = vmul.f32 %v947, %v1330
        %v1361 = vmul.f32 %v952, %v1335
        %v1362 = vadd.f32 %v1358, %v1340
        %v1363 = vadd.f32 %v1359, %v1345
        %v1364 = vadd.f32 %v1360, %v1350
        %v1365 = vadd.f32 %v1361, %v1355
        %v1366 = vmax.f32 %v1362, 0.0
        %v1367 = vmax.f32 %v1363, 0.0
        %v1368 = vmax.f32 %v1364, 0.0
        %v1369 = vmax.f32 %v1365, 0.0
        %1370 = vrot.lane.b32.xlu0 %v1366, 1
        %v1371 = vpop.permute.xlu0 %1370
        %1372 = vrot.lane.b32.xlu0 %v1367, 1
        %v1373 = vpop.permute.xlu0 %1372
        %1374 = vrot.lane.b32.xlu0 %v1368, 1
        %v1375 = vpop.permute.xlu0 %1374
        %1376 = vrot.lane.b32.xlu0 %v1369, 1
        %v1377 = vpop.permute.xlu0 %1376
        %v1378 = vmul.f32 %v1371, %v796
        %v1379 = vmul.f32 %v1373, %v796
        %v1380 = vmul.f32 %v1375, %v796
        %v1381 = vmul.f32 %v1377, %v796
        %1382 = vst [vmem:[#allocation2] sm:$0xff] %v1378
        %1383 = vst [vmem:[#allocation2 + $0x8] sm:$0xff] %v1379
        %1384 = vst [vmem:[#allocation2 + $0x10] sm:$0xff] %v1380
        %1385 = vst [vmem:[#allocation2 + $0x18] sm:$0xff] %v1381
        %1386 = vst [vmem:[#allocation2 + $0x20] sm:$0xff] %v1366
        %1387 = vst [vmem:[#allocation2 + $0x28] sm:$0xff] %v1367
        %1388 = vst [vmem:[#allocation2 + $0x30] sm:$0xff] %v1368
        %1389 = vst [vmem:[#allocation2 + $0x38] sm:$0xff] %v1369
        %1390 = vrot.lane.b32.xlu0 %v1366, 127
        %v1391 = vpop.permute.xlu0 %1390
        %1392 = vrot.lane.b32.xlu0 %v1367, 127
        %v1393 = vpop.permute.xlu0 %1392
        %1394 = vrot.lane.b32.xlu0 %v1368, 127
        %v1395 = vpop.permute.xlu0 %1394
        %1396 = vrot.lane.b32.xlu0 %v1369, 127
        %v1397 = vpop.permute.xlu0 %1396
        %v1398 = vmul.f32 %v1391, %v820
        %v1399 = vmul.f32 %v1393, %v820
        %v1400 = vmul.f32 %v1395, %v820
        %v1401 = vmul.f32 %v1397, %v820
        %1402 = vst [vmem:[#allocation2 + $0x40] sm:$0xff] %v1398
        %1403 = vst [vmem:[#allocation2 + $0x48] sm:$0xff] %v1399
        %1404 = vst [vmem:[#allocation2 + $0x50] sm:$0xff] %v1400
        %1405 = vst [vmem:[#allocation2 + $0x58] sm:$0xff] %v1401
        %v1406 = vld [vmem:[#allocation2] sm:$0xff]
        %v1407 = vld [vmem:[#allocation2 + $0x8] sm:$0xff]
        %v1408 = vld [vmem:[#allocation2 + $0x10] sm:$0xff]
        %v1409 = vld [vmem:[#allocation2 + $0x18] sm:$0xff]
        %v1410 = vld [vmem:[#allocation2 + $0x20] sm:$0xff]
        %v1411 = vld [vmem:[#allocation2 + $0x28] sm:$0xff]
        %v1412 = vld [vmem:[#allocation2 + $0x30] sm:$0xff]
        %v1413 = vld [vmem:[#allocation2 + $0x38] sm:$0xff]
        %v1414 = vld [vmem:[#allocation2 + $0x40] sm:$0xff]
        %v1415 = vld [vmem:[#allocation2 + $0x48] sm:$0xff]
        %v1416 = vld [vmem:[#allocation2 + $0x50] sm:$0xff]
        %v1417 = vld [vmem:[#allocation2 + $0x58] sm:$0xff]
        %1418 = vset.pattern.permute.xlu0 5
        %1419 = vperm.xlu0 %1418, %v323
        %v1420 = vpop.permute.xlu0 %1419
        %1422 = vset.pattern.permute.xlu0 5
        %1423 = vperm.xlu0 %1422, %v324
        %v1424 = vpop.permute.xlu0 %1423
        %1426 = vset.pattern.permute.xlu0 5
        %1427 = vperm.xlu0 %1426, %v325
        %v1428 = vpop.permute.xlu0 %1427
        %1430 = vset.pattern.permute.xlu0 5
        %1431 = vperm.xlu0 %1430, %v326
        %v1432 = vpop.permute.xlu0 %1431
        %v1435 = vsel %vm857, %v332, 0
        %v1438 = vsel %vm857, %v333, 0
        %v1441 = vsel %vm857, %v334, 0
        %v1444 = vsel %vm857, %v335, 0
        %1446 = vmatprep.subr.mxu0 0.0
        %1447 = vmatpush1.msra.mxu0 0.0
        %1448 = vmatprep.subr.mxu0 0.0
        %1449 = vmatpush1.msra.mxu0 0.0
        %1450 = vmatprep.subr.mxu0 0.0
        %1451 = vmatpush1.msra.mxu0 0.0
        %1452 = vmatprep.subr.mxu0 0.0
        %1453 = vmatpush1.msra.mxu0 0.0
        %1454 = vmatprep.subr.mxu0 0.0
        %1455 = vmatpush1.msra.mxu0 %v1417
        %1456 = vmatprep.subr.mxu0 0.0
        %1457 = vmatpush1.msra.mxu0 %v1416
        %1458 = vmatprep.subr.mxu0 0.0
        %1459 = vmatpush1.msra.mxu0 %v1415
        %1460 = vmatprep.subr.mxu0 0.0
        %1461 = vmatpush1.msra.mxu0 %v1414
        %1462 = vmatprep.subr.mxu0 0.0
        %1463 = vmatpush1.msra.mxu0 %v1413
        %1464 = vmatprep.subr.mxu0 0.0
        %1465 = vmatpush1.msra.mxu0 %v1412
        %1466 = vmatprep.subr.mxu0 0.0
        %1467 = vmatpush1.msra.mxu0 %v1411
        %1468 = vmatprep.subr.mxu0 0.0
        %1469 = vmatpush1.msra.mxu0 %v1410
        %1470 = vmatprep.subr.mxu0 0.0
        %1471 = vmatpush1.msra.mxu0 %v1409
        %1472 = vmatprep.subr.mxu0 0.0
        %1473 = vmatpush1.msra.mxu0 %v1408
        %1474 = vmatprep.subr.mxu0 0.0
        %1475 = vmatpush1.msra.mxu0 %v1407
        %1476 = vmatprep.subr.mxu0 0.0
        %1477 = vmatpush1.msra.mxu0 %v1406
        %1478 = vmatprep.subr.mxu0 0.0
        %1479 = vmatpush2.msra.mxu0 0.0
        %1480 = vmatprep.subr.mxu0 0.0
        %1481 = vmatpush2.msra.mxu0 0.0
        %1482 = vmatprep.subr.mxu0 0.0
        %1483 = vmatpush2.msra.mxu0 0.0
        %1484 = vmatprep.subr.mxu0 0.0
        %1485 = vmatpush2.msra.mxu0 0.0
        %1486 = vmatprep.subr.mxu0 0.0
        %1487 = vmatpush2.msra.mxu0 0.0
        %1488 = vmatprep.subr.mxu0 0.0
        %1489 = vmatpush2.msra.mxu0 0.0
        %1490 = vmatprep.subr.mxu0 0.0
        %1491 = vmatpush2.msra.mxu0 0.0
        %1492 = vmatprep.subr.mxu0 0.0
        %1493 = vmatpush2.msra.mxu0 0.0
        %1494 = vmatprep.subr.mxu0 0.0
        %1495 = vmatpush2.msra.mxu0 0.0
        %1496 = vmatprep.subr.mxu0 0.0
        %1497 = vmatpush2.msra.mxu0 0.0
        %1498 = vmatprep.subr.mxu0 0.0
        %1499 = vmatpush2.msra.mxu0 0.0
        %1500 = vmatprep.subr.mxu0 0.0
        %1501 = vmatpush2.msra.mxu0 0.0
        %1502 = vmatprep.subr.mxu0 0.0
        %1503 = vmatpush2.msra.mxu0 0.0
        %1504 = vmatprep.subr.mxu0 0.0
        %1505 = vmatpush2.msra.mxu0 0.0
        %1506 = vmatprep.subr.mxu0 0.0
        %1507 = vmatpush2.msra.mxu0 0.0
        %1508 = vmatprep.subr.mxu0 0.0
        %1509 = vmatpush2.msra.mxu0 0.0
        %1510 = vmatprep.mubr.f32.mxu0 0.0
        %1511 = vmatmul.mubr.f32.gmra.mxu0 %v1435
        %v1512 = vpop.f32.mrf.mxu0
        %v1513 = vadd.f32 %v1420, %v1512
        %v1514 = vpop.f32.mrf.mxu0
        %1515 = vmatprep.mubr.f32.mxu0 0.0
        %1516 = vmatmul.mubr.f32.gmra.mxu0 %v1438
        %v1517 = vpop.f32.mrf.mxu0
        %v1518 = vadd.f32 %v1424, %v1517
        %v1519 = vpop.f32.mrf.mxu0
        %1520 = vmatprep.mubr.f32.mxu0 0.0
        %1521 = vmatmul.mubr.f32.gmra.mxu0 %v1441
        %v1522 = vpop.f32.mrf.mxu0
        %v1523 = vadd.f32 %v1428, %v1522
        %v1524 = vpop.f32.mrf.mxu0
        %1525 = vmatprep.mubr.f32.mxu0 0.0
        %1526 = vmatmul.mubr.f32.gmra.mxu0 %v1444
        %v1527 = vpop.f32.mrf.mxu0
        %v1528 = vadd.f32 %v1432, %v1527
        %v1529 = vpop.f32.mrf.mxu0
        %1530 = vdwg.mxu0
        %v1531 = vadd.f32 %v1513, %v292
        %v1532 = vadd.f32 %v1518, %v293
        %v1533 = vadd.f32 %v1523, %v294
        %v1534 = vadd.f32 %v1528, %v295
        %1535 = vst [vmem:[%s286] sm:$0xff] %v1531
        %1536 = vst [vmem:[%s286 + $0x8] sm:$0xff] %v1532
        %1537 = vst [vmem:[%s286 + $0x10] sm:$0xff] %v1533
        %1538 = vst [vmem:[%s286 + $0x18] sm:$0xff] %v1534
        %s1539 = sand.u32 %s182, 1
        %s1540 = scalar_lea.sflag [#allocation5], %s1539
        %s1541 = sand.u32 %s182, 1
        %s1542 = smul.addr %s1541, 32
        %s1543 = scalar_lea.vmem [#allocation6], %s1542
        // Predicated region
        $region53: #{tpu_custom_call.1} parent=47 // pred_check
          %p1544 = pneg %p192
        $region54: #{tpu_custom_call.1} parent=47 // pred_check_branch
          %1546 = sbr.rel (%p1544) target = $region56
        $region55: #{tpu_custom_call.1} parent=47 // pred_region
          %s1548 = ssub.s32 512, 512
          %1549 = vsyncadd %s1540, %s1548
          %s1550 = smul.addr %s22, 4
          %s1551 = smul.addr %s1550, 128
          %s1552 = scalar_lea.hbm %s7, %s1551
          %s1553 = sshll.u32 %s1543, 4
          %s1554 = int_to_ptr.vmem [resolvable:$true] %s1553
          %1559 = dma.vmem_to_hbm [thread:$0]  %s1554, 512, %s1552, %s1540, 128, 128, 8
        $region56: #{tpu_custom_call.1} parent=47 // pred_fallthru
          _
      $region48: #{tpu_custom_call.1} parent=5 // pred_fallthru
        _
      %p1560 = scmp.le.s32.totalorder 2, %s17
      // Predicated region
      $region57: #{tpu_custom_call.1} parent=5 // pred_check
        %p1561 = pneg %p1560
      $region58: #{tpu_custom_call.1} parent=5 // pred_check_branch
        %1563 = sbr.rel (%p1561) target = $region60
      $region59: #{tpu_custom_call.1} parent=5 // pred_region
        %s1564 = ssub.s32 %s17, 2
        // Predicated region
        $region61: #{tpu_custom_call.1} parent=59 // pred_check
          %p1565 = pneg %p198
        $region62: #{tpu_custom_call.1} parent=59 // pred_check_branch
          %1567 = sbr.rel (%p1565) target = $region64
        $region63: #{tpu_custom_call.1} parent=59 // pred_region
          %s1568 = sand.u32 %s183, 1
          %s1569 = scalar_lea.sflag [#allocation5], %s1568
          %s1570 = sand.u32 %s183, 1
          %s1571 = smul.addr %s1570, 32
          %s1572 = scalar_lea.vmem [#allocation6], %s1571
          %1573 = dma.done %s1569, 512
        $region64: #{tpu_custom_call.1} parent=59 // pred_fallthru
          _
      $region60: #{tpu_custom_call.1} parent=5 // pred_fallthru
        _
    $region6: #{tpu_custom_call.1} parent=1 // loop_footer
      %s21 = sadd.s32 1, %s17
    $region7: #{tpu_custom_call.1} parent=1 // loop_footer_branch
      %16 = sbr.rel target = $region3
    $region8: #{tpu_custom_call.1} parent=1 // loop_exit
      _
    %1574 = vsyncpa [#allocation4], 1
    %s1575 = scalar_lea.sflag [#allocation4], 1
    %1576 = vsyncpa %s1575, 1
    %1577 = vsyncpa [#allocation5], 1
    %s1578 = scalar_lea.sflag [#allocation5], 1
    %1579 = vsyncpa %s1578, 1

</llo_original>
